<compile_context>
chip_gen: v6e
topology: v6e:2x2x1
jax: 0.10.0
libtpu: 0.0.40
codegen_flags: <defaults>
</compile_context>

<pallas_src>
import math

import jax
import jax.numpy as jnp
from jax.experimental import pallas as pl
from jax.experimental.pallas import tpu as pltpu


def _round_up(n, m):
    return ((n + m - 1) // m) * m


def lstm_cell_kernel(x_ref, hx_ref, cx_ref, wx_ref, wh_ref, b_ref, out_ref):
    H = cx_ref.shape[-1]
    mxu_dtype = wx_ref.dtype

    # Two MXU dots into one f32 accumulator (x / hx never concatenated in HBM;
    # the bf16 cast happens on the VPU here instead of as a separate XLA op).
    z = jnp.dot(x_ref[...].astype(mxu_dtype), wx_ref[...],
                preferred_element_type=jnp.float32)
    z = z + jnp.dot(hx_ref[...].astype(mxu_dtype), wh_ref[...],
                    preferred_element_type=jnp.float32)
    z = z + b_ref[...]

    # One full-width tanh (EUP) for all four gates.  The i/f/o columns of W/b
    # were pre-scaled by 1/2, so there t = tanh(z/2) = 2*sigmoid(z) - 1, while
    # the cell columns carry plain tanh(z).
    t = jnp.tanh(z)
    ti = t[:, 0 * H:1 * H]
    tf = t[:, 1 * H:2 * H]
    tg = t[:, 2 * H:3 * H]
    to = t[:, 3 * H:4 * H]

    cx = cx_ref[...].astype(jnp.float32)
    # sigmoid(z) = 0.5 * (t + 1); the 0.5 is folded into the products below.
    cy = 0.5 * ((tf + 1.0) * cx + (ti + 1.0) * tg)
    hy = (0.5 * (to + 1.0)) * jnp.tanh(cy)

    # Lane-dense store: one (TB, 2H) slab = [hy | cy].
    out_ref[...] = jnp.concatenate([hy, cy], axis=-1).astype(out_ref.dtype)


def prepare_lstm_params(wx, bx, wh, bh, compute_dtype=jnp.bfloat16):
    """One-time parameter prep (transpose, 1/2-scale folding, bias combine, cast).

    wx: (4H, I), wh: (4H, H), bx/bh: (4H,) in PyTorch nn.Linear layout.
    Returns wx_f: (I, 4H), wh_f: (H, 4H) in `compute_dtype` with i/f/o columns
    pre-scaled by 1/2, and b_f: (1, 4H) f32 with the same scaling.
    """
    H4 = wx.shape[0]
    H = H4 // 4
    col = jnp.arange(H4)
    is_cell = (col >= 2 * H) & (col < 3 * H)
    scale = jnp.where(is_cell, 1.0, 0.5).astype(jnp.float32)
    wx_f = (wx.T.astype(jnp.float32) * scale[None, :]).astype(compute_dtype)
    wh_f = (wh.T.astype(jnp.float32) * scale[None, :]).astype(compute_dtype)
    b_f = ((bx + bh).astype(jnp.float32) * scale).reshape(1, H4)
    return wx_f, wh_f, b_f


def _estimate_vmem_bytes(TB, I, H, in_bytes, w_bytes, out_bytes, weight_bufs):
    weights = weight_bufs * (((I + H) * 4 * H) * w_bytes + 4 * H * 4)
    acts = 2 * TB * (I + 2 * H) * in_bytes      # x / hx / cx tiles (double-buffered)
    outs = 2 * TB * 2 * H * out_bytes           # hy|cy slab (double-buffered)
    interm = 4 * TB * 4 * H * 4                 # f32 gates / tanh working set
    return weights + acts + outs + interm


def _const_spec(shape, single_buffer):
    # Grid-invariant operand: constant index_map; single-buffered when supported.
    if single_buffer:
        return pl.BlockSpec(shape, lambda b: (0, 0), pipeline_mode=pl.Buffered(1))
    return pl.BlockSpec(shape, lambda b: (0, 0))


def lstm_cell_pallas(x, hx, cx, wx_f, wh_f, b_f, *, batch_tile=256,
                     out_dtype=None, vmem_budget_bytes=40 * 2**20):
    """x: (B, I); hx, cx: (B, H); wx_f: (I, 4H); wh_f: (H, 4H); b_f: (1, 4H)."""
    B, I = x.shape
    H = hx.shape[1]
    out_dtype = x.dtype if out_dtype is None else out_dtype

    in_bytes = jnp.dtype(x.dtype).itemsize
    w_bytes = jnp.dtype(wx_f.dtype).itemsize
    out_bytes = jnp.dtype(out_dtype).itemsize

    # ---- batch-tile selection --------------------------------------------
    TB = min(B, batch_tile)
    if TB < B:
        TB = _round_up(TB, 8)
    # v7x: when the batch is big enough to amortize a per-core weight fetch,
    # force >= 2 grid steps so both TensorCores get work.
    if B >= 512 and pl.cdiv(B, TB) < 2:
        TB = min(TB, _round_up(pl.cdiv(B, 2), 256))
    # Shrink to a VMEM budget with headroom for v7x's 64 MiB physical VMEM
    # (conservatively assume double-buffered weights for this check).
    while TB > 8 and _estimate_vmem_bytes(
            TB, I, H, in_bytes, w_bytes, out_bytes, 2) > vmem_budget_bytes:
        TB = max(8, _round_up(TB // 2, 8))

    grid = (pl.cdiv(B, TB),)
    est = _estimate_vmem_bytes(TB, I, H, in_bytes, w_bytes, out_bytes, 2)
    # Explicit scoped-VMEM limit: above the 16 MiB (v5e) / 32 MiB defaults when
    # needed, capped below v7x's 64 MiB physical.
    vmem_limit = int(min(max(2 * est, 32 * 2**20), 64 * 2**20))

    def build(single_buffer):
        return pl.pallas_call(
            lstm_cell_kernel,
            out_shape=jax.ShapeDtypeStruct((B, 2 * H), out_dtype),
            grid=grid,
            in_specs=[
                pl.BlockSpec((TB, I), lambda b: (b, 0)),       # x  (batch-tiled)
                pl.BlockSpec((TB, H), lambda b: (b, 0)),       # hx (batch-tiled)
                pl.BlockSpec((TB, H), lambda b: (b, 0)),       # cx (batch-tiled)
                _const_spec((I, 4 * H), single_buffer),        # Wx (resident)
                _const_spec((H, 4 * H), single_buffer),        # Wh (resident)
                _const_spec((1, 4 * H), single_buffer),        # bias (resident)
            ],
            out_specs=pl.BlockSpec((TB, 2 * H), lambda b: (b, 0)),
            compiler_params=pltpu.CompilerParams(
                dimension_semantics=("parallel",),
                vmem_limit_bytes=vmem_limit),
        )

    try:
        out = build(single_buffer=True)(x, hx, cx, wx_f, wh_f, b_f)
    except Exception:
        # Fallback if this jax build rejects single-buffered pipeline_mode.
        out = build(single_buffer=False)(x, hx, cx, wx_f, wh_f, b_f)

    hy = out[:, :H]
    cy = out[:, H:]
    return hy, cy


def lstm_cell_ref(x, hx, cx, wx, bx, wh, bh):
    """Plain-JAX (f32) reference mirroring the PyTorch forward."""
    gates = x @ wx.T + bx + hx @ wh.T + bh
    H = hx.shape[1]
    i, f, g, o = jnp.split(gates, 4, axis=1)
    i = jax.nn.sigmoid(i)
    f = jax.nn.sigmoid(f)
    g = jnp.tanh(g)
    o = jax.nn.sigmoid(o)
    cy = cx * f + i * g
    hy = o * jnp.tanh(cy)
    return hy, cy


if __name__ == "__main__":
    B = 8
    INPUT = 128    # multiple of 128 -> lane-aligned MXU operand
    HIDDEN = 128   # multiple of 128 -> gate slices and hy|cy slab vreg-aligned

    key = jax.random.PRNGKey(0)
    kx, kh, kc, k1, k2, k3, k4 = jax.random.split(key, 7)

    std = 1.0 / math.sqrt(HIDDEN)  # matches reset_parameters(): U(-std, std)
    wx = jax.random.uniform(k1, (4 * HIDDEN, INPUT), jnp.float32, -std, std)
    bx = jax.random.uniform(k2, (4 * HIDDEN,), jnp.float32, -std, std)
    wh = jax.random.uniform(k3, (4 * HIDDEN, HIDDEN), jnp.float32, -std, std)
    bh = jax.random.uniform(k4, (4 * HIDDEN,), jnp.float32, -std, std)

    x = jax.random.normal(kx, (B, INPUT), jnp.float32)
    hx = jax.random.normal(kh, (B, HIDDEN), jnp.float32)
    cx = jax.random.normal(kc, (B, HIDDEN), jnp.float32)

    # One-time parameter prep (transpose / scale-fold / bias combine / bf16 cast).
    wx_f, wh_f, b_f = prepare_lstm_params(wx, bx, wh, bh)

    hy, cy = lstm_cell_pallas(x, hx, cx, wx_f, wh_f, b_f)
    jax.block_until_ready((hy, cy))

    hy_ref, cy_ref = lstm_cell_ref(x, hx, cx, wx, bx, wh, bh)
    # bf16 matmul operands (f32 accumulation) -> loosened tolerance vs f32 ref.
    assert jnp.allclose(hy, hy_ref, atol=2e-2, rtol=2e-2), (
        float(jnp.max(jnp.abs(hy - hy_ref))))
    assert jnp.allclose(cy, cy_ref, atol=2e-2, rtol=2e-2), (
        float(jnp.max(jnp.abs(cy - cy_ref))))

    print("KERNEL_OK")
</pallas_src>

<mosaic_0001>
module attributes {stable_mosaic.version = 11 : i64} {
  func.func @lstm_cell_kernel(%arg0: i32, %arg1: memref<8x128xf32, #tpu.memory_space<vmem>>, %arg2: memref<8x128xf32, #tpu.memory_space<vmem>>, %arg3: memref<8x128xf32, #tpu.memory_space<vmem>>, %arg4: memref<128x512xbf16, #tpu.memory_space<vmem>>, %arg5: memref<128x512xbf16, #tpu.memory_space<vmem>>, %arg6: memref<1x512xf32, #tpu.memory_space<vmem>>, %arg7: memref<8x256xf32, #tpu.memory_space<vmem>>) attributes {dimension_semantics = [#tpu.dimension_semantics<parallel>], iteration_bounds = array<i64: 1>, scalar_prefetch = 0 : i64, scratch_operands = 0 : i64, tpu.core_type = #tpu.core_type<tc>, window_params = [{transform_indices = @transform_0, window_bounds = array<i64: 8, 128>}, {transform_indices = @transform_1, window_bounds = array<i64: 8, 128>}, {transform_indices = @transform_2, window_bounds = array<i64: 8, 128>}, {pipeline_mode = #tpu.pipeline_mode<synchronous>, transform_indices = @transform_3, window_bounds = array<i64: 128, 512>}, {pipeline_mode = #tpu.pipeline_mode<synchronous>, transform_indices = @transform_4, window_bounds = array<i64: 128, 512>}, {pipeline_mode = #tpu.pipeline_mode<synchronous>, transform_indices = @transform_5, window_bounds = array<i64: 1, 512>}, {transform_indices = @transform_6, window_bounds = array<i64: 8, 256>}]} {
    %c0 = arith.constant 0 : index
    %c0_0 = arith.constant 0 : index
    %0 = vector.load %arg1[%c0, %c0_0] : memref<8x128xf32, #tpu.memory_space<vmem>>, vector<8x128xf32>
    %1 = arith.truncf %0 : vector<8x128xf32> to vector<8x128xbf16>
    %c0_1 = arith.constant 0 : index
    %c0_2 = arith.constant 0 : index
    %2 = vector.load %arg4[%c0_1, %c0_2] : memref<128x512xbf16, #tpu.memory_space<vmem>>, vector<128x512xbf16>
    %cst = arith.constant dense<0.000000e+00> : vector<8x512xf32>
    %3 = tpu.matmul %1, %2, %cst {dimension_numbers = #tpu.dot_dimension_numbers<[1], [0], [0], [1], [0, 0, 1, 1], [], []>} : vector<8x128xbf16>, vector<128x512xbf16>, vector<8x512xf32> -> vector<8x512xf32>
    %c0_3 = arith.constant 0 : index
    %c0_4 = arith.constant 0 : index
    %4 = vector.load %arg2[%c0_3, %c0_4] : memref<8x128xf32, #tpu.memory_space<vmem>>, vector<8x128xf32>
    %5 = arith.truncf %4 : vector<8x128xf32> to vector<8x128xbf16>
    %c0_5 = arith.constant 0 : index
    %c0_6 = arith.constant 0 : index
    %6 = vector.load %arg5[%c0_5, %c0_6] : memref<128x512xbf16, #tpu.memory_space<vmem>>, vector<128x512xbf16>
    %cst_7 = arith.constant dense<0.000000e+00> : vector<8x512xf32>
    %7 = tpu.matmul %5, %6, %cst_7 {dimension_numbers = #tpu.dot_dimension_numbers<[1], [0], [0], [1], [0, 0, 1, 1], [], []>} : vector<8x128xbf16>, vector<128x512xbf16>, vector<8x512xf32> -> vector<8x512xf32>
    %8 = arith.addf %3, %7 : vector<8x512xf32>
    %c0_8 = arith.constant 0 : index
    %c0_9 = arith.constant 0 : index
    %9 = vector.load %arg6[%c0_8, %c0_9] : memref<1x512xf32, #tpu.memory_space<vmem>>, vector<1x512xf32>
    %10 = vector.broadcast %9 : vector<1x512xf32> to vector<8x512xf32>
    %11 = arith.addf %8, %10 : vector<8x512xf32>
    %12 = math.tanh %11 : vector<8x512xf32>
    %13 = vector.extract_strided_slice %12 {offsets = [0, 0], sizes = [8, 128], strides = [1, 1]} : vector<8x512xf32> to vector<8x128xf32>
    %14 = vector.extract_strided_slice %12 {offsets = [0, 128], sizes = [8, 128], strides = [1, 1]} : vector<8x512xf32> to vector<8x128xf32>
    %15 = vector.extract_strided_slice %12 {offsets = [0, 256], sizes = [8, 128], strides = [1, 1]} : vector<8x512xf32> to vector<8x128xf32>
    %16 = vector.extract_strided_slice %12 {offsets = [0, 384], sizes = [8, 128], strides = [1, 1]} : vector<8x512xf32> to vector<8x128xf32>
    %c0_10 = arith.constant 0 : index
    %c0_11 = arith.constant 0 : index
    %17 = vector.load %arg3[%c0_10, %c0_11] : memref<8x128xf32, #tpu.memory_space<vmem>>, vector<8x128xf32>
    %cst_12 = arith.constant 1.000000e+00 : f32
    %18 = vector.broadcast %cst_12 : f32 to vector<8x128xf32>
    %19 = arith.addf %14, %18 : vector<8x128xf32>
    %20 = arith.mulf %19, %17 : vector<8x128xf32>
    %cst_13 = arith.constant 1.000000e+00 : f32
    %21 = vector.broadcast %cst_13 : f32 to vector<8x128xf32>
    %22 = arith.addf %13, %21 : vector<8x128xf32>
    %23 = arith.mulf %22, %15 : vector<8x128xf32>
    %24 = arith.addf %20, %23 : vector<8x128xf32>
    %cst_14 = arith.constant 5.000000e-01 : f32
    %25 = vector.broadcast %cst_14 : f32 to vector<8x128xf32>
    %26 = arith.mulf %25, %24 : vector<8x128xf32>
    %cst_15 = arith.constant 1.000000e+00 : f32
    %27 = vector.broadcast %cst_15 : f32 to vector<8x128xf32>
    %28 = arith.addf %16, %27 : vector<8x128xf32>
    %cst_16 = arith.constant 5.000000e-01 : f32
    %29 = vector.broadcast %cst_16 : f32 to vector<8x128xf32>
    %30 = arith.mulf %29, %28 : vector<8x128xf32>
    %31 = math.tanh %26 : vector<8x128xf32>
    %32 = arith.mulf %30, %31 : vector<8x128xf32>
    %33 = tpu.concatenate %32, %26 in 1 : vector<8x128xf32>, vector<8x128xf32> -> vector<8x256xf32>
    %c0_17 = arith.constant 0 : index
    %c0_18 = arith.constant 0 : index
    %34 = vector.load %arg7[%c0_17, %c0_18] : memref<8x256xf32, #tpu.memory_space<vmem>>, vector<8x256xf32>
    tpu.vector_store %arg7[%c0_17, %c0_18], %33 {strides = array<i32>} : memref<8x256xf32, #tpu.memory_space<vmem>>, vector<8x256xf32>,
    return
  }
  func.func @transform_0(%arg0: i32) -> (i32, i32) {
    %c0_i32 = arith.constant 0 : i32
    %c0_i32_0 = arith.constant 0 : i32
    return %arg0, %c0_i32 : i32, i32
  }
  func.func @transform_1(%arg0: i32) -> (i32, i32) {
    %c0_i32 = arith.constant 0 : i32
    %c0_i32_0 = arith.constant 0 : i32
    return %arg0, %c0_i32 : i32, i32
  }
  func.func @transform_2(%arg0: i32) -> (i32, i32) {
    %c0_i32 = arith.constant 0 : i32
    %c0_i32_0 = arith.constant 0 : i32
    return %arg0, %c0_i32 : i32, i32
  }
  func.func @transform_3(%arg0: i32) -> (i32, i32) {
    %c0_i32 = arith.constant 0 : i32
    %c0_i32_0 = arith.constant 0 : i32
    %c0_i32_1 = arith.constant 0 : i32
    return %c0_i32, %c0_i32_0 : i32, i32
  }
  func.func @transform_4(%arg0: i32) -> (i32, i32) {
    %c0_i32 = arith.constant 0 : i32
    %c0_i32_0 = arith.constant 0 : i32
    %c0_i32_1 = arith.constant 0 : i32
    return %c0_i32, %c0_i32_0 : i32, i32
  }
  func.func @transform_5(%arg0: i32) -> (i32, i32) {
    %c0_i32 = arith.constant 0 : i32
    %c0_i32_0 = arith.constant 0 : i32
    %c0_i32_1 = arith.constant 0 : i32
    return %c0_i32, %c0_i32_0 : i32, i32
  }
  func.func @transform_6(%arg0: i32) -> (i32, i32) {
    %c0_i32 = arith.constant 0 : i32
    %c0_i32_0 = arith.constant 0 : i32
    return %arg0, %c0_i32 : i32, i32
  }
}

module attributes {stable_mosaic.version = 11 : i64} {
  func.func @lstm_cell_kernel(%arg0: i32, %arg1: memref<8x128xf32, #tpu.memory_space<vmem>>, %arg2: memref<8x128xf32, #tpu.memory_space<vmem>>, %arg3: memref<8x128xf32, #tpu.memory_space<vmem>>, %arg4: memref<128x512xbf16, #tpu.memory_space<vmem>>, %arg5: memref<128x512xbf16, #tpu.memory_space<vmem>>, %arg6: memref<1x512xf32, #tpu.memory_space<vmem>>, %arg7: memref<8x256xf32, #tpu.memory_space<vmem>>) attributes {dimension_semantics = [#tpu.dimension_semantics<parallel>], iteration_bounds = array<i64: 1>, scalar_prefetch = 0 : i64, scratch_operands = 0 : i64, tpu.core_type = #tpu.core_type<tc>, window_params = [{transform_indices = @transform_0, window_bounds = array<i64: 8, 128>}, {transform_indices = @transform_1, window_bounds = array<i64: 8, 128>}, {transform_indices = @transform_2, window_bounds = array<i64: 8, 128>}, {pipeline_mode = #tpu.pipeline_mode<synchronous>, transform_indices = @transform_3, window_bounds = array<i64: 128, 512>}, {pipeline_mode = #tpu.pipeline_mode<synchronous>, transform_indices = @transform_4, window_bounds = array<i64: 128, 512>}, {pipeline_mode = #tpu.pipeline_mode<synchronous>, transform_indices = @transform_5, window_bounds = array<i64: 1, 512>}, {transform_indices = @transform_6, window_bounds = array<i64: 8, 256>}]} {
    %c0 = arith.constant 0 : index
    %c0_0 = arith.constant 0 : index
    %0 = vector.load %arg1[%c0, %c0_0] : memref<8x128xf32, #tpu.memory_space<vmem>>, vector<8x128xf32>
    %1 = arith.truncf %0 : vector<8x128xf32> to vector<8x128xbf16>
    %c0_1 = arith.constant 0 : index
    %c0_2 = arith.constant 0 : index
    %2 = vector.load %arg4[%c0_1, %c0_2] : memref<128x512xbf16, #tpu.memory_space<vmem>>, vector<128x512xbf16>
    %cst = arith.constant dense<0.000000e+00> : vector<8x512xf32>
    %3 = tpu.matmul %1, %2, %cst {dimension_numbers = #tpu.dot_dimension_numbers<[1], [0], [0], [1], [0, 0, 1, 1], [], []>} : vector<8x128xbf16>, vector<128x512xbf16>, vector<8x512xf32> -> vector<8x512xf32>
    %c0_3 = arith.constant 0 : index
    %c0_4 = arith.constant 0 : index
    %4 = vector.load %arg2[%c0_3, %c0_4] : memref<8x128xf32, #tpu.memory_space<vmem>>, vector<8x128xf32>
    %5 = arith.truncf %4 : vector<8x128xf32> to vector<8x128xbf16>
    %c0_5 = arith.constant 0 : index
    %c0_6 = arith.constant 0 : index
    %6 = vector.load %arg5[%c0_5, %c0_6] : memref<128x512xbf16, #tpu.memory_space<vmem>>, vector<128x512xbf16>
    %cst_7 = arith.constant dense<0.000000e+00> : vector<8x512xf32>
    %7 = tpu.matmul %5, %6, %cst_7 {dimension_numbers = #tpu.dot_dimension_numbers<[1], [0], [0], [1], [0, 0, 1, 1], [], []>} : vector<8x128xbf16>, vector<128x512xbf16>, vector<8x512xf32> -> vector<8x512xf32>
    %8 = arith.addf %3, %7 : vector<8x512xf32>
    %c0_8 = arith.constant 0 : index
    %c0_9 = arith.constant 0 : index
    %9 = vector.load %arg6[%c0_8, %c0_9] : memref<1x512xf32, #tpu.memory_space<vmem>>, vector<1x512xf32>
    %10 = vector.broadcast %9 : vector<1x512xf32> to vector<8x512xf32>
    %11 = arith.addf %8, %10 : vector<8x512xf32>
    %12 = math.tanh %11 : vector<8x512xf32>
    %13 = vector.extract_strided_slice %12 {offsets = [0, 0], sizes = [8, 128], strides = [1, 1]} : vector<8x512xf32> to vector<8x128xf32>
    %14 = vector.extract_strided_slice %12 {offsets = [0, 128], sizes = [8, 128], strides = [1, 1]} : vector<8x512xf32> to vector<8x128xf32>
    %15 = vector.extract_strided_slice %12 {offsets = [0, 256], sizes = [8, 128], strides = [1, 1]} : vector<8x512xf32> to vector<8x128xf32>
    %16 = vector.extract_strided_slice %12 {offsets = [0, 384], sizes = [8, 128], strides = [1, 1]} : vector<8x512xf32> to vector<8x128xf32>
    %c0_10 = arith.constant 0 : index
    %c0_11 = arith.constant 0 : index
    %17 = vector.load %arg3[%c0_10, %c0_11] : memref<8x128xf32, #tpu.memory_space<vmem>>, vector<8x128xf32>
    %cst_12 = arith.constant 1.000000e+00 : f32
    %18 = vector.broadcast %cst_12 : f32 to vector<8x128xf32>
    %19 = arith.addf %14, %18 : vector<8x128xf32>
    %20 = arith.mulf %19, %17 : vector<8x128xf32>
    %cst_13 = arith.constant 1.000000e+00 : f32
    %21 = vector.broadcast %cst_13 : f32 to vector<8x128xf32>
    %22 = arith.addf %13, %21 : vector<8x128xf32>
    %23 = arith.mulf %22, %15 : vector<8x128xf32>
    %24 = arith.addf %20, %23 : vector<8x128xf32>
    %cst_14 = arith.constant 5.000000e-01 : f32
    %25 = vector.broadcast %cst_14 : f32 to vector<8x128xf32>
    %26 = arith.mulf %25, %24 : vector<8x128xf32>
    %cst_15 = arith.constant 1.000000e+00 : f32
    %27 = vector.broadcast %cst_15 : f32 to vector<8x128xf32>
    %28 = arith.addf %16, %27 : vector<8x128xf32>
    %cst_16 = arith.constant 5.000000e-01 : f32
    %29 = vector.broadcast %cst_16 : f32 to vector<8x128xf32>
    %30 = arith.mulf %29, %28 : vector<8x128xf32>
    %31 = math.tanh %26 : vector<8x128xf32>
    %32 = arith.mulf %30, %31 : vector<8x128xf32>
    %33 = tpu.concatenate %32, %26 in 1 : vector<8x128xf32>, vector<8x128xf32> -> vector<8x256xf32>
    %c0_17 = arith.constant 0 : index
    %c0_18 = arith.constant 0 : index
    %34 = vector.load %arg7[%c0_17, %c0_18] : memref<8x256xf32, #tpu.memory_space<vmem>>, vector<8x256xf32>
    tpu.vector_store %arg7[%c0_17, %c0_18], %33 {strides = array<i32>} : memref<8x256xf32, #tpu.memory_space<vmem>>, vector<8x256xf32>,
    return
  }
  func.func @transform_0(%arg0: i32) -> (i32, i32) {
    %c0_i32 = arith.constant 0 : i32
    %c0_i32_0 = arith.constant 0 : i32
    return %arg0, %c0_i32 : i32, i32
  }
  func.func @transform_1(%arg0: i32) -> (i32, i32) {
    %c0_i32 = arith.constant 0 : i32
    %c0_i32_0 = arith.constant 0 : i32
    return %arg0, %c0_i32 : i32, i32
  }
  func.func @transform_2(%arg0: i32) -> (i32, i32) {
    %c0_i32 = arith.constant 0 : i32
    %c0_i32_0 = arith.constant 0 : i32
    return %arg0, %c0_i32 : i32, i32
  }
  func.func @transform_3(%arg0: i32) -> (i32, i32) {
    %c0_i32 = arith.constant 0 : i32
    %c0_i32_0 = arith.constant 0 : i32
    %c0_i32_1 = arith.constant 0 : i32
    return %c0_i32, %c0_i32_0 : i32, i32
  }
  func.func @transform_4(%arg0: i32) -> (i32, i32) {
    %c0_i32 = arith.constant 0 : i32
    %c0_i32_0 = arith.constant 0 : i32
    %c0_i32_1 = arith.constant 0 : i32
    return %c0_i32, %c0_i32_0 : i32, i32
  }
  func.func @transform_5(%arg0: i32) -> (i32, i32) {
    %c0_i32 = arith.constant 0 : i32
    %c0_i32_0 = arith.constant 0 : i32
    %c0_i32_1 = arith.constant 0 : i32
    return %c0_i32, %c0_i32_0 : i32, i32
  }
  func.func @transform_6(%arg0: i32) -> (i32, i32) {
    %c0_i32 = arith.constant 0 : i32
    %c0_i32_0 = arith.constant 0 : i32
    return %arg0, %c0_i32 : i32, i32
  }
}

</mosaic_0001>

<llo_original>
// kernel: tpu_custom_call.1
$region0: #{tpu_custom_call.1}
  #allocation0 [shape = 'u32[]', space=smem, size = 0x4, offset = 0x4, fixed_abs, tag = 'smem constant byte address 0x4 - core index']
  #allocation1 [shape = 'u32[144,128]{1,0:T(1,128)}', space=vmem, size = 0x12000, scoped, tag = 'internal scratch']
  %s0 = inlined_call_operand.hbm [shape: f32[8,128], index: 0, kind: input, shape index: {}]
  %s1 = inlined_call_operand.hbm [shape: f32[8,128], index: 1, kind: input, shape index: {}]
  %s2 = inlined_call_operand.hbm [shape: f32[8,128], index: 2, kind: input, shape index: {}]
  %s3 = inlined_call_operand.hbm [shape: bf16[128,512], index: 3, kind: input, shape index: {}]
  %s4 = inlined_call_operand.hbm [shape: bf16[128,512], index: 4, kind: input, shape index: {}]
  %s5 = inlined_call_operand.vmem [shape: f32[1,512], index: 5, kind: input, shape index: {}]
  %s6 = inlined_call_operand.hbm [shape: f32[8,256], index: 6, kind: output, shape index: {}]
  %s7 = sld [smem:[#allocation0]]
  $region54: #{tpu_custom_call.1} parent=0
    _
  %s9 = ssub.s32 1, %s7
  %s10 = scalar_select 0, %s9, %s7
  $region1: #{tpu_custom_call.1} parent=0
    #allocation2 [shape = 'u8[4096]{0}', space=vmem, size = 0x1000, scoped, tag = 'input window, operand 0, single buffered']
    #allocation3 [shape = 's32[1]{0}', space=sflag, size = 0x4, scoped, tag = 'scoped memory for tpu_custom_call.1']
    #allocation4 [shape = 's32[1]{0}', space=sflag, size = 0x4, scoped, tag = 'scoped memory for tpu_custom_call.1']
    #allocation5 [shape = 'u8[4096]{0}', space=vmem, size = 0x1000, scoped, tag = 'input window, operand 1, single buffered']
    #allocation6 [shape = 's32[1]{0}', space=sflag, size = 0x4, scoped, tag = 'scoped memory for tpu_custom_call.1']
    #allocation7 [shape = 'u8[4096]{0}', space=vmem, size = 0x1000, scoped, tag = 'input window, operand 2, single buffered']
    #allocation8 [shape = 'u8[131072]{0}', space=vmem, size = 0x20000, scoped, tag = 'input window, operand 3, single buffered']
    #allocation9 [shape = 's32[1]{0}', space=sflag, size = 0x4, scoped, tag = 'scoped memory for tpu_custom_call.1']
    #allocation10 [shape = 'u8[131072]{0}', space=vmem, size = 0x20000, scoped, tag = 'input window, operand 4, single buffered']
    #allocation11 [shape = 'u8[8192]{0}', space=vmem, size = 0x2000, scoped, tag = 'output window, operand 0, single buffered']
    %11 = vsyncpa [#allocation3], 0
    %12 = vsyncpa [#allocation6], 0
    %13 = vsyncpa [#allocation9], 0
    %14 = vsyncpa [#allocation4], 0
    // Predicated region
    $region2: #{tpu_custom_call.1} parent=1 // pred_check
      _
    $region3: #{tpu_custom_call.1} parent=1 // pred_check_branch
      %16 = sbr.rel (0) target = $region5
    $region4: #{tpu_custom_call.1} parent=1 // pred_region
      %s18 = ssub.s32 128, 128
      %19 = vsyncadd [#allocation3], %s18
      %s21 = sshll.u32 [#allocation2], 4
      %s22 = int_to_ptr.vmem [resolvable:$true] %s21
      %24 = dma.hbm_to_vmem [thread:$0]  %s0, 128, %s22, [#allocation3]
    $region5: #{tpu_custom_call.1} parent=1 // pred_fallthru
      _
    // Predicated region
    $region6: #{tpu_custom_call.1} parent=1 // pred_check
      _
    $region7: #{tpu_custom_call.1} parent=1 // pred_check_branch
      %26 = sbr.rel (0) target = $region9
    $region8: #{tpu_custom_call.1} parent=1 // pred_region
      %s28 = ssub.s32 128, 128
      %29 = vsyncadd [#allocation6], %s28
      %s31 = sshll.u32 [#allocation5], 4
      %s32 = int_to_ptr.vmem [resolvable:$true] %s31
      %34 = dma.hbm_to_vmem [thread:$0]  %s1, 128, %s32, [#allocation6]
    $region9: #{tpu_custom_call.1} parent=1 // pred_fallthru
      _
    // Predicated region
    $region10: #{tpu_custom_call.1} parent=1 // pred_check
      _
    $region11: #{tpu_custom_call.1} parent=1 // pred_check_branch
      %36 = sbr.rel (0) target = $region13
    $region12: #{tpu_custom_call.1} parent=1 // pred_region
      %s38 = ssub.s32 128, 128
      %39 = vsyncadd [#allocation6], %s38
      %s41 = sshll.u32 [#allocation7], 4
      %s42 = int_to_ptr.vmem [resolvable:$true] %s41
      %44 = dma.hbm_to_vmem [thread:$0]  %s2, 128, %s42, [#allocation6]
    $region13: #{tpu_custom_call.1} parent=1 // pred_fallthru
      _
    // Predicated region
    $region14: #{tpu_custom_call.1} parent=1 // pred_check
      _
    $region15: #{tpu_custom_call.1} parent=1 // pred_check_branch
      %46 = sbr.rel (0) target = $region17
    $region16: #{tpu_custom_call.1} parent=1 // pred_region
      %s48 = ssub.s32 4096, 4096
      %49 = vsyncadd [#allocation9], %s48
      %s50 = sshll.u32 [#allocation8], 4
      %s51 = int_to_ptr.vmem [resolvable:$true] %s50
      %56 = dma.hbm_to_vmem [thread:$0]  %s3, 4096, %s51, [#allocation9], 256, 256, 16
    $region17: #{tpu_custom_call.1} parent=1 // pred_fallthru
      _
    // Predicated region
    $region18: #{tpu_custom_call.1} parent=1 // pred_check
      _
    $region19: #{tpu_custom_call.1} parent=1 // pred_check_branch
      %58 = sbr.rel (0) target = $region21
    $region20: #{tpu_custom_call.1} parent=1 // pred_region
      %s60 = ssub.s32 4096, 4096
      %61 = vsyncadd [#allocation9], %s60
      %s62 = sshll.u32 [#allocation10], 4
      %s63 = int_to_ptr.vmem [resolvable:$true] %s62
      %68 = dma.hbm_to_vmem [thread:$0]  %s4, 4096, %s63, [#allocation9], 256, 256, 16
    $region21: #{tpu_custom_call.1} parent=1 // pred_fallthru
      _
    // Predicated region
    $region22: #{tpu_custom_call.1} parent=1 // pred_check
      _
    $region23: #{tpu_custom_call.1} parent=1 // pred_check_branch
      %70 = sbr.rel (0) target = $region25
    $region24: #{tpu_custom_call.1} parent=1 // pred_region
      _
    $region25: #{tpu_custom_call.1} parent=1 // pred_fallthru
      _
    // Predicated region
    $region26: #{tpu_custom_call.1} parent=1 // pred_check
      _
    $region27: #{tpu_custom_call.1} parent=1 // pred_check_branch
      %72 = sbr.rel (0) target = $region29
    $region28: #{tpu_custom_call.1} parent=1 // pred_region
      %73 = dma.done [#allocation3], 128
    $region29: #{tpu_custom_call.1} parent=1 // pred_fallthru
      _
    // Predicated region
    $region30: #{tpu_custom_call.1} parent=1 // pred_check
      _
    $region31: #{tpu_custom_call.1} parent=1 // pred_check_branch
      %75 = sbr.rel (0) target = $region33
    $region32: #{tpu_custom_call.1} parent=1 // pred_region
      %76 = dma.done [#allocation6], 128
    $region33: #{tpu_custom_call.1} parent=1 // pred_fallthru
      _
    // Predicated region
    $region34: #{tpu_custom_call.1} parent=1 // pred_check
      _
    $region35: #{tpu_custom_call.1} parent=1 // pred_check_branch
      %78 = sbr.rel (0) target = $region37
    $region36: #{tpu_custom_call.1} parent=1 // pred_region
      %79 = dma.done [#allocation6], 128
    $region37: #{tpu_custom_call.1} parent=1 // pred_fallthru
      _
    // Predicated region
    $region38: #{tpu_custom_call.1} parent=1 // pred_check
      _
    $region39: #{tpu_custom_call.1} parent=1 // pred_check_branch
      %81 = sbr.rel (0) target = $region41
    $region40: #{tpu_custom_call.1} parent=1 // pred_region
      %82 = dma.done [#allocation9], 4096
    $region41: #{tpu_custom_call.1} parent=1 // pred_fallthru
      _
    // Predicated region
    $region42: #{tpu_custom_call.1} parent=1 // pred_check
      _
    $region43: #{tpu_custom_call.1} parent=1 // pred_check_branch
      %84 = sbr.rel (0) target = $region45
    $region44: #{tpu_custom_call.1} parent=1 // pred_region
      %85 = dma.done [#allocation9], 4096
    $region45: #{tpu_custom_call.1} parent=1 // pred_fallthru
      _
    %v87 = vld [vmem:[#allocation2] sm:$0xff]
    %v88 = vpack.c.bf16 %v87, %v87
    %v89 = vld [vmem:[#allocation8] sm:$0xff]
    %v90 = vld [vmem:[#allocation8 + $0x8] sm:$0xff]
    %v91 = vld [vmem:[#allocation8 + $0x10] sm:$0xff]
    %v92 = vld [vmem:[#allocation8 + $0x18] sm:$0xff]
    %v93 = vld [vmem:[#allocation8 + $0x20] sm:$0xff]
    %v94 = vld [vmem:[#allocation8 + $0x28] sm:$0xff]
    %v95 = vld [vmem:[#allocation8 + $0x30] sm:$0xff]
    %v96 = vld [vmem:[#allocation8 + $0x38] sm:$0xff]
    %v97 = vld [vmem:[#allocation8 + $0x40] sm:$0xff]
    %v98 = vld [vmem:[#allocation8 + $0x48] sm:$0xff]
    %v99 = vld [vmem:[#allocation8 + $0x50] sm:$0xff]
    %v100 = vld [vmem:[#allocation8 + $0x58] sm:$0xff]
    %v101 = vld [vmem:[#allocation8 + $0x60] sm:$0xff]
    %v102 = vld [vmem:[#allocation8 + $0x68] sm:$0xff]
    %v103 = vld [vmem:[#allocation8 + $0x70] sm:$0xff]
    %v104 = vld [vmem:[#allocation8 + $0x78] sm:$0xff]
    %v105 = vld [vmem:[#allocation8 + $0x80] sm:$0xff]
    %v106 = vld [vmem:[#allocation8 + $0x88] sm:$0xff]
    %v107 = vld [vmem:[#allocation8 + $0x90] sm:$0xff]
    %v108 = vld [vmem:[#allocation8 + $0x98] sm:$0xff]
    %v109 = vld [vmem:[#allocation8 + $0xa0] sm:$0xff]
    %v110 = vld [vmem:[#allocation8 + $0xa8] sm:$0xff]
    %v111 = vld [vmem:[#allocation8 + $0xb0] sm:$0xff]
    %v112 = vld [vmem:[#allocation8 + $0xb8] sm:$0xff]
    %v113 = vld [vmem:[#allocation8 + $0xc0] sm:$0xff]
    %v114 = vld [vmem:[#allocation8 + $0xc8] sm:$0xff]
    %v115 = vld [vmem:[#allocation8 + $0xd0] sm:$0xff]
    %v116 = vld [vmem:[#allocation8 + $0xd8] sm:$0xff]
    %v117 = vld [vmem:[#allocation8 + $0xe0] sm:$0xff]
    %v118 = vld [vmem:[#allocation8 + $0xe8] sm:$0xff]
    %v119 = vld [vmem:[#allocation8 + $0xf0] sm:$0xff]
    %v120 = vld [vmem:[#allocation8 + $0xf8] sm:$0xff]
    %v121 = vld [vmem:[#allocation5] sm:$0xff]
    %v122 = vpack.c.bf16 %v121, %v121
    %v123 = vld [vmem:[#allocation10] sm:$0xff]
    %v124 = vld [vmem:[#allocation10 + $0x8] sm:$0xff]
    %v125 = vld [vmem:[#allocation10 + $0x10] sm:$0xff]
    %v126 = vld [vmem:[#allocation10 + $0x18] sm:$0xff]
    %v127 = vld [vmem:[#allocation10 + $0x20] sm:$0xff]
    %v128 = vld [vmem:[#allocation10 + $0x28] sm:$0xff]
    %v129 = vld [vmem:[#allocation10 + $0x30] sm:$0xff]
    %v130 = vld [vmem:[#allocation10 + $0x38] sm:$0xff]
    %v131 = vld [vmem:[#allocation10 + $0x40] sm:$0xff]
    %v132 = vld [vmem:[#allocation10 + $0x48] sm:$0xff]
    %v133 = vld [vmem:[#allocation10 + $0x50] sm:$0xff]
    %v134 = vld [vmem:[#allocation10 + $0x58] sm:$0xff]
    %v135 = vld [vmem:[#allocation10 + $0x60] sm:$0xff]
    %v136 = vld [vmem:[#allocation10 + $0x68] sm:$0xff]
    %v137 = vld [vmem:[#allocation10 + $0x70] sm:$0xff]
    %v138 = vld [vmem:[#allocation10 + $0x78] sm:$0xff]
    %v139 = vld [vmem:[#allocation10 + $0x80] sm:$0xff]
    %v140 = vld [vmem:[#allocation10 + $0x88] sm:$0xff]
    %v141 = vld [vmem:[#allocation10 + $0x90] sm:$0xff]
    %v142 = vld [vmem:[#allocation10 + $0x98] sm:$0xff]
    %v143 = vld [vmem:[#allocation10 + $0xa0] sm:$0xff]
    %v144 = vld [vmem:[#allocation10 + $0xa8] sm:$0xff]
    %v145 = vld [vmem:[#allocation10 + $0xb0] sm:$0xff]
    %v146 = vld [vmem:[#allocation10 + $0xb8] sm:$0xff]
    %v147 = vld [vmem:[#allocation10 + $0xc0] sm:$0xff]
    %v148 = vld [vmem:[#allocation10 + $0xc8] sm:$0xff]
    %v149 = vld [vmem:[#allocation10 + $0xd0] sm:$0xff]
    %v150 = vld [vmem:[#allocation10 + $0xd8] sm:$0xff]
    %v151 = vld [vmem:[#allocation10 + $0xe0] sm:$0xff]
    %v152 = vld [vmem:[#allocation10 + $0xe8] sm:$0xff]
    %v153 = vld [vmem:[#allocation10 + $0xf0] sm:$0xff]
    %v154 = vld [vmem:[#allocation10 + $0xf8] sm:$0xff]
    %v187 = vunpack.c.l.b16 %v123
    %v188 = vunpack.c.h.b16 %v123
    %v189 = vunpack.c.l.b16 %v124
    %v190 = vunpack.c.h.b16 %v124
    %v191 = vunpack.c.l.b16 %v125
    %v192 = vunpack.c.h.b16 %v125
    %v193 = vunpack.c.l.b16 %v126
    %v194 = vunpack.c.h.b16 %v126
    %v195 = vunpack.c.l.b16 %v127
    %v196 = vunpack.c.h.b16 %v127
    %v197 = vunpack.c.l.b16 %v128
    %v198 = vunpack.c.h.b16 %v128
    %v199 = vunpack.c.l.b16 %v129
    %v200 = vunpack.c.h.b16 %v129
    %v201 = vunpack.c.l.b16 %v130
    %v202 = vunpack.c.h.b16 %v130
    %v203 = vunpack.c.l.b16 %v131
    %v204 = vunpack.c.h.b16 %v131
    %v205 = vunpack.c.l.b16 %v132
    %v206 = vunpack.c.h.b16 %v132
    %v207 = vunpack.c.l.b16 %v133
    %v208 = vunpack.c.h.b16 %v133
    %v209 = vunpack.c.l.b16 %v134
    %v210 = vunpack.c.h.b16 %v134
    %v211 = vunpack.c.l.b16 %v135
    %v212 = vunpack.c.h.b16 %v135
    %v213 = vunpack.c.l.b16 %v136
    %v214 = vunpack.c.h.b16 %v136
    %v215 = vunpack.c.l.b16 %v137
    %v216 = vunpack.c.h.b16 %v137
    %v217 = vunpack.c.l.b16 %v138
    %v218 = vunpack.c.h.b16 %v138
    %v219 = vunpack.c.l.b16 %v139
    %v220 = vunpack.c.h.b16 %v139
    %v221 = vunpack.c.l.b16 %v140
    %v222 = vunpack.c.h.b16 %v140
    %v223 = vunpack.c.l.b16 %v141
    %v224 = vunpack.c.h.b16 %v141
    %v225 = vunpack.c.l.b16 %v142
    %v226 = vunpack.c.h.b16 %v142
    %v227 = vunpack.c.l.b16 %v143
    %v228 = vunpack.c.h.b16 %v143
    %v229 = vunpack.c.l.b16 %v144
    %v230 = vunpack.c.h.b16 %v144
    %v231 = vunpack.c.l.b16 %v145
    %v232 = vunpack.c.h.b16 %v145
    %v233 = vunpack.c.l.b16 %v146
    %v234 = vunpack.c.h.b16 %v146
    %v235 = vunpack.c.l.b16 %v147
    %v236 = vunpack.c.h.b16 %v147
    %v237 = vunpack.c.l.b16 %v148
    %v238 = vunpack.c.h.b16 %v148
    %v239 = vunpack.c.l.b16 %v149
    %v240 = vunpack.c.h.b16 %v149
    %v241 = vunpack.c.l.b16 %v150
    %v242 = vunpack.c.h.b16 %v150
    %v243 = vunpack.c.l.b16 %v151
    %v244 = vunpack.c.h.b16 %v151
    %v245 = vunpack.c.l.b16 %v152
    %v246 = vunpack.c.h.b16 %v152
    %v247 = vunpack.c.l.b16 %v153
    %v248 = vunpack.c.h.b16 %v153
    %v249 = vunpack.c.l.b16 %v154
    %v250 = vunpack.c.h.b16 %v154
    %v251 = vpack.c.b16 %v191, %v187
    %v252 = vpack.c.b16 %v192, %v188
    %v253 = vpack.c.b16 %v193, %v189
    %v254 = vpack.c.b16 %v194, %v190
    %v255 = vpack.c.b16 %v199, %v195
    %v256 = vpack.c.b16 %v200, %v196
    %v257 = vpack.c.b16 %v201, %v197
    %v258 = vpack.c.b16 %v202, %v198
    %v259 = vpack.c.b16 %v207, %v203
    %v260 = vpack.c.b16 %v208, %v204
    %v261 = vpack.c.b16 %v209, %v205
    %v262 = vpack.c.b16 %v210, %v206
    %v263 = vpack.c.b16 %v215, %v211
    %v264 = vpack.c.b16 %v216, %v212
    %v265 = vpack.c.b16 %v217, %v213
    %v266 = vpack.c.b16 %v218, %v214
    %v267 = vpack.c.b16 %v223, %v219
    %v268 = vpack.c.b16 %v224, %v220
    %v269 = vpack.c.b16 %v225, %v221
    %v270 = vpack.c.b16 %v226, %v222
    %v271 = vpack.c.b16 %v231, %v227
    %v272 = vpack.c.b16 %v232, %v228
    %v273 = vpack.c.b16 %v233, %v229
    %v274 = vpack.c.b16 %v234, %v230
    %v275 = vpack.c.b16 %v239, %v235
    %v276 = vpack.c.b16 %v240, %v236
    %v277 = vpack.c.b16 %v241, %v237
    %v278 = vpack.c.b16 %v242, %v238
    %v279 = vpack.c.b16 %v247, %v243
    %v280 = vpack.c.b16 %v248, %v244
    %v281 = vpack.c.b16 %v249, %v245
    %v282 = vpack.c.b16 %v250, %v246
    %315 = vmatprep.subr.bf16.mxu0 %v280
    %316 = vmatpush1.bf16.msra.mxu0 %v279
    %317 = vmatprep.subr.bf16.mxu0 %v276
    %318 = vmatpush1.bf16.msra.mxu0 %v275
    %319 = vmatprep.subr.bf16.mxu0 %v272
    %320 = vmatpush1.bf16.msra.mxu0 %v271
    %321 = vmatprep.subr.bf16.mxu0 %v268
    %322 = vmatpush1.bf16.msra.mxu0 %v267
    %323 = vmatprep.subr.bf16.mxu0 %v264
    %324 = vmatpush1.bf16.msra.mxu0 %v263
    %325 = vmatprep.subr.bf16.mxu0 %v260
    %326 = vmatpush1.bf16.msra.mxu0 %v259
    %327 = vmatprep.subr.bf16.mxu0 %v256
    %328 = vmatpush1.bf16.msra.mxu0 %v255
    %329 = vmatprep.subr.bf16.mxu0 %v252
    %330 = vmatpush1.bf16.msra.mxu0 %v251
    %331 = vmatprep.subr.bf16.mxu0 0
    %332 = vmatpush2.bf16.msra.mxu0 0
    %333 = vmatprep.subr.bf16.mxu0 0
    %334 = vmatpush2.bf16.msra.mxu0 0
    %335 = vmatprep.subr.bf16.mxu0 0
    %336 = vmatpush2.bf16.msra.mxu0 0
    %337 = vmatprep.subr.bf16.mxu0 0
    %338 = vmatpush2.bf16.msra.mxu0 0
    %339 = vmatprep.subr.bf16.mxu0 0
    %340 = vmatpush2.bf16.msra.mxu0 0
    %341 = vmatprep.subr.bf16.mxu0 0
    %342 = vmatpush2.bf16.msra.mxu0 0
    %343 = vmatprep.subr.bf16.mxu0 0
    %344 = vmatpush2.bf16.msra.mxu0 0
    %345 = vmatprep.subr.bf16.mxu0 0
    %346 = vmatpush2.bf16.msra.mxu0 0
    %347 = vmatprep.mubr.bf16.mxu0 0
    %348 = vmatmul.mubr.bf16.gmra.mxu0 %v122
    %v349 = vpop.f32.mrf.mxu0
    %v350 = vadd.f32 0.0, %v349
    %v351 = vpop.f32.mrf.mxu0
    %v352 = vadd.f32 0.0, %v351
    %v353 = vpop.f32.mrf.mxu0
    %v354 = vpop.f32.mrf.mxu0
    %355 = vdwg.mxu0
    %356 = vmatprep.subr.bf16.mxu0 %v282
    %357 = vmatpush1.bf16.msra.mxu0 %v281
    %358 = vmatprep.subr.bf16.mxu0 %v278
    %359 = vmatpush1.bf16.msra.mxu0 %v277
    %360 = vmatprep.subr.bf16.mxu0 %v274
    %361 = vmatpush1.bf16.msra.mxu0 %v273
    %362 = vmatprep.subr.bf16.mxu0 %v270
    %363 = vmatpush1.bf16.msra.mxu0 %v269
    %364 = vmatprep.subr.bf16.mxu0 %v266
    %365 = vmatpush1.bf16.msra.mxu0 %v265
    %366 = vmatprep.subr.bf16.mxu0 %v262
    %367 = vmatpush1.bf16.msra.mxu0 %v261
    %368 = vmatprep.subr.bf16.mxu0 %v258
    %369 = vmatpush1.bf16.msra.mxu0 %v257
    %370 = vmatprep.subr.bf16.mxu0 %v254
    %371 = vmatpush1.bf16.msra.mxu0 %v253
    %372 = vmatprep.subr.bf16.mxu0 0
    %373 = vmatpush2.bf16.msra.mxu0 0
    %374 = vmatprep.subr.bf16.mxu0 0
    %375 = vmatpush2.bf16.msra.mxu0 0
    %376 = vmatprep.subr.bf16.mxu0 0
    %377 = vmatpush2.bf16.msra.mxu0 0
    %378 = vmatprep.subr.bf16.mxu0 0
    %379 = vmatpush2.bf16.msra.mxu0 0
    %380 = vmatprep.subr.bf16.mxu0 0
    %381 = vmatpush2.bf16.msra.mxu0 0
    %382 = vmatprep.subr.bf16.mxu0 0
    %383 = vmatpush2.bf16.msra.mxu0 0
    %384 = vmatprep.subr.bf16.mxu0 0
    %385 = vmatpush2.bf16.msra.mxu0 0
    %386 = vmatprep.subr.bf16.mxu0 0
    %387 = vmatpush2.bf16.msra.mxu0 0
    %388 = vmatprep.mubr.bf16.mxu0 0
    %389 = vmatmul.mubr.bf16.gmra.mxu0 %v122
    %v390 = vpop.f32.mrf.mxu0
    %v391 = vadd.f32 0.0, %v390
    %v392 = vpop.f32.mrf.mxu0
    %v393 = vadd.f32 0.0, %v392
    %v394 = vpop.f32.mrf.mxu0
    %v395 = vpop.f32.mrf.mxu0
    %396 = vdwg.mxu0
    %v429 = vunpack.c.l.b16 %v89
    %v430 = vunpack.c.h.b16 %v89
    %v431 = vunpack.c.l.b16 %v90
    %v432 = vunpack.c.h.b16 %v90
    %v433 = vunpack.c.l.b16 %v91
    %v434 = vunpack.c.h.b16 %v91
    %v435 = vunpack.c.l.b16 %v92
    %v436 = vunpack.c.h.b16 %v92
    %v437 = vunpack.c.l.b16 %v93
    %v438 = vunpack.c.h.b16 %v93
    %v439 = vunpack.c.l.b16 %v94
    %v440 = vunpack.c.h.b16 %v94
    %v441 = vunpack.c.l.b16 %v95
    %v442 = vunpack.c.h.b16 %v95
    %v443 = vunpack.c.l.b16 %v96
    %v444 = vunpack.c.h.b16 %v96
    %v445 = vunpack.c.l.b16 %v97
    %v446 = vunpack.c.h.b16 %v97
    %v447 = vunpack.c.l.b16 %v98
    %v448 = vunpack.c.h.b16 %v98
    %v449 = vunpack.c.l.b16 %v99
    %v450 = vunpack.c.h.b16 %v99
    %v451 = vunpack.c.l.b16 %v100
    %v452 = vunpack.c.h.b16 %v100
    %v453 = vunpack.c.l.b16 %v101
    %v454 = vunpack.c.h.b16 %v101
    %v455 = vunpack.c.l.b16 %v102
    %v456 = vunpack.c.h.b16 %v102
    %v457 = vunpack.c.l.b16 %v103
    %v458 = vunpack.c.h.b16 %v103
    %v459 = vunpack.c.l.b16 %v104
    %v460 = vunpack.c.h.b16 %v104
    %v461 = vunpack.c.l.b16 %v105
    %v462 = vunpack.c.h.b16 %v105
    %v463 = vunpack.c.l.b16 %v106
    %v464 = vunpack.c.h.b16 %v106
    %v465 = vunpack.c.l.b16 %v107
    %v466 = vunpack.c.h.b16 %v107
    %v467 = vunpack.c.l.b16 %v108
    %v468 = vunpack.c.h.b16 %v108
    %v469 = vunpack.c.l.b16 %v109
    %v470 = vunpack.c.h.b16 %v109
    %v471 = vunpack.c.l.b16 %v110
    %v472 = vunpack.c.h.b16 %v110
    %v473 = vunpack.c.l.b16 %v111
    %v474 = vunpack.c.h.b16 %v111
    %v475 = vunpack.c.l.b16 %v112
    %v476 = vunpack.c.h.b16 %v112
    %v477 = vunpack.c.l.b16 %v113
    %v478 = vunpack.c.h.b16 %v113
    %v479 = vunpack.c.l.b16 %v114
    %v480 = vunpack.c.h.b16 %v114
    %v481 = vunpack.c.l.b16 %v115
    %v482 = vunpack.c.h.b16 %v115
    %v483 = vunpack.c.l.b16 %v116
    %v484 = vunpack.c.h.b16 %v116
    %v485 = vunpack.c.l.b16 %v117
    %v486 = vunpack.c.h.b16 %v117
    %v487 = vunpack.c.l.b16 %v118
    %v488 = vunpack.c.h.b16 %v118
    %v489 = vunpack.c.l.b16 %v119
    %v490 = vunpack.c.h.b16 %v119
    %v491 = vunpack.c.l.b16 %v120
    %v492 = vunpack.c.h.b16 %v120
    %v493 = vpack.c.b16 %v433, %v429
    %v494 = vpack.c.b16 %v434, %v430
    %v495 = vpack.c.b16 %v435, %v431
    %v496 = vpack.c.b16 %v436, %v432
    %v497 = vpack.c.b16 %v441, %v437
    %v498 = vpack.c.b16 %v442, %v438
    %v499 = vpack.c.b16 %v443, %v439
    %v500 = vpack.c.b16 %v444, %v440
    %v501 = vpack.c.b16 %v449, %v445
    %v502 = vpack.c.b16 %v450, %v446
    %v503 = vpack.c.b16 %v451, %v447
    %v504 = vpack.c.b16 %v452, %v448
    %v505 = vpack.c.b16 %v457, %v453
    %v506 = vpack.c.b16 %v458, %v454
    %v507 = vpack.c.b16 %v459, %v455
    %v508 = vpack.c.b16 %v460, %v456
    %v509 = vpack.c.b16 %v465, %v461
    %v510 = vpack.c.b16 %v466, %v462
    %v511 = vpack.c.b16 %v467, %v463
    %v512 = vpack.c.b16 %v468, %v464
    %v513 = vpack.c.b16 %v473, %v469
    %v514 = vpack.c.b16 %v474, %v470
    %v515 = vpack.c.b16 %v475, %v471
    %v516 = vpack.c.b16 %v476, %v472
    %v517 = vpack.c.b16 %v481, %v477
    %v518 = vpack.c.b16 %v482, %v478
    %v519 = vpack.c.b16 %v483, %v479
    %v520 = vpack.c.b16 %v484, %v480
    %v521 = vpack.c.b16 %v489, %v485
    %v522 = vpack.c.b16 %v490, %v486
    %v523 = vpack.c.b16 %v491, %v487
    %v524 = vpack.c.b16 %v492, %v488
    %557 = vmatprep.subr.bf16.mxu0 %v522
    %558 = vmatpush1.bf16.msra.mxu0 %v521
    %559 = vmatprep.subr.bf16.mxu0 %v518
    %560 = vmatpush1.bf16.msra.mxu0 %v517
    %561 = vmatprep.subr.bf16.mxu0 %v514
    %562 = vmatpush1.bf16.msra.mxu0 %v513
    %563 = vmatprep.subr.bf16.mxu0 %v510
    %564 = vmatpush1.bf16.msra.mxu0 %v509
    %565 = vmatprep.subr.bf16.mxu0 %v506
    %566 = vmatpush1.bf16.msra.mxu0 %v505
    %567 = vmatprep.subr.bf16.mxu0 %v502
    %568 = vmatpush1.bf16.msra.mxu0 %v501
    %569 = vmatprep.subr.bf16.mxu0 %v498
    %570 = vmatpush1.bf16.msra.mxu0 %v497
    %571 = vmatprep.subr.bf16.mxu0 %v494
    %572 = vmatpush1.bf16.msra.mxu0 %v493
    %573 = vmatprep.subr.bf16.mxu0 0
    %574 = vmatpush2.bf16.msra.mxu0 0
    %575 = vmatprep.subr.bf16.mxu0 0
    %576 = vmatpush2.bf16.msra.mxu0 0
    %577 = vmatprep.subr.bf16.mxu0 0
    %578 = vmatpush2.bf16.msra.mxu0 0
    %579 = vmatprep.subr.bf16.mxu0 0
    %580 = vmatpush2.bf16.msra.mxu0 0
    %581 = vmatprep.subr.bf16.mxu0 0
    %582 = vmatpush2.bf16.msra.mxu0 0
    %583 = vmatprep.subr.bf16.mxu0 0
    %584 = vmatpush2.bf16.msra.mxu0 0
    %585 = vmatprep.subr.bf16.mxu0 0
    %586 = vmatpush2.bf16.msra.mxu0 0
    %587 = vmatprep.subr.bf16.mxu0 0
    %588 = vmatpush2.bf16.msra.mxu0 0
    %589 = vmatprep.mubr.bf16.mxu0 0
    %590 = vmatmul.mubr.bf16.gmra.mxu0 %v88
    %v591 = vpop.f32.mrf.mxu0
    %v592 = vadd.f32 %v350, %v591
    %v593 = vpop.f32.mrf.mxu0
    %v594 = vadd.f32 %v352, %v593
    %v595 = vpop.f32.mrf.mxu0
    %v596 = vpop.f32.mrf.mxu0
    %597 = vdwg.mxu0
    %598 = vmatprep.subr.bf16.mxu0 %v524
    %599 = vmatpush1.bf16.msra.mxu0 %v523
    %600 = vmatprep.subr.bf16.mxu0 %v520
    %601 = vmatpush1.bf16.msra.mxu0 %v519
    %602 = vmatprep.subr.bf16.mxu0 %v516
    %603 = vmatpush1.bf16.msra.mxu0 %v515
    %604 = vmatprep.subr.bf16.mxu0 %v512
    %605 = vmatpush1.bf16.msra.mxu0 %v511
    %606 = vmatprep.subr.bf16.mxu0 %v508
    %607 = vmatpush1.bf16.msra.mxu0 %v507
    %608 = vmatprep.subr.bf16.mxu0 %v504
    %609 = vmatpush1.bf16.msra.mxu0 %v503
    %610 = vmatprep.subr.bf16.mxu0 %v500
    %611 = vmatpush1.bf16.msra.mxu0 %v499
    %612 = vmatprep.subr.bf16.mxu0 %v496
    %613 = vmatpush1.bf16.msra.mxu0 %v495
    %614 = vmatprep.subr.bf16.mxu0 0
    %615 = vmatpush2.bf16.msra.mxu0 0
    %616 = vmatprep.subr.bf16.mxu0 0
    %617 = vmatpush2.bf16.msra.mxu0 0
    %618 = vmatprep.subr.bf16.mxu0 0
    %619 = vmatpush2.bf16.msra.mxu0 0
    %620 = vmatprep.subr.bf16.mxu0 0
    %621 = vmatpush2.bf16.msra.mxu0 0
    %622 = vmatprep.subr.bf16.mxu0 0
    %623 = vmatpush2.bf16.msra.mxu0 0
    %624 = vmatprep.subr.bf16.mxu0 0
    %625 = vmatpush2.bf16.msra.mxu0 0
    %626 = vmatprep.subr.bf16.mxu0 0
    %627 = vmatpush2.bf16.msra.mxu0 0
    %628 = vmatprep.subr.bf16.mxu0 0
    %629 = vmatpush2.bf16.msra.mxu0 0
    %630 = vmatprep.mubr.bf16.mxu0 0
    %631 = vmatmul.mubr.bf16.gmra.mxu0 %v88
    %v632 = vpop.f32.mrf.mxu0
    %v633 = vadd.f32 %v391, %v632
    %v634 = vpop.f32.mrf.mxu0
    %v635 = vadd.f32 %v393, %v634
    %v636 = vpop.f32.mrf.mxu0
    %v637 = vpop.f32.mrf.mxu0
    %638 = vdwg.mxu0
    %v639 = vld [vmem:[%s5] sm:$0xf]
    %v641 = vlaneseq
    %v642 = vshrl.u32 %v641, 7
    %v643 = vsub.s32 0, %v642
    %v644 = vrot.slane %v639, %v643
    %v645 = vlaneseq
    %v646 = vshrl.u32 %v645, 7
    %v647 = vsub.s32 1, %v646
    %v648 = vrot.slane %v639, %v647
    %v649 = vlaneseq
    %v650 = vshrl.u32 %v649, 7
    %v651 = vsub.s32 2, %v650
    %v652 = vrot.slane %v639, %v651
    %v653 = vlaneseq
    %v654 = vshrl.u32 %v653, 7
    %v655 = vsub.s32 3, %v654
    %v656 = vrot.slane %v639, %v655
    %v661 = vadd.f32 %v592, %v644
    %v662 = vadd.f32 %v594, %v648
    %v663 = vadd.f32 %v633, %v652
    %v664 = vadd.f32 %v635, %v656
    %v665 = vtanh.pop %v661
    %v666 = vtanh.pop %v662
    %v667 = vtanh.pop %v663
    %v668 = vtanh.pop %v664
    %v669 = vld [vmem:[#allocation7] sm:$0xff]
    %v670 = vadd.f32 %v666, 1.0
    %v671 = vmul.f32 %v670, %v669
    %v672 = vadd.f32 %v665, 1.0
    %v673 = vmul.f32 %v672, %v667
    %v674 = vadd.f32 %v671, %v673
    %v675 = vmul.f32 %v674, 0.5
    %v676 = vadd.f32 %v668, 1.0
    %v677 = vmul.f32 %v676, 0.5
    %v678 = vtanh.pop %v675
    %v679 = vmul.f32 %v677, %v678
    %680 = vst [vmem:[#allocation11] sm:$0xff] %v679
    %681 = vst [vmem:[#allocation11 + $0x8] sm:$0xff] %v675
    // Predicated region
    $region46: #{tpu_custom_call.1} parent=1 // pred_check
      _
    $region47: #{tpu_custom_call.1} parent=1 // pred_check_branch
      %683 = sbr.rel (0) target = $region49
    $region48: #{tpu_custom_call.1} parent=1 // pred_region
      %s685 = ssub.s32 256, 256
      %686 = vsyncadd [#allocation4], %s685
      %s688 = sshll.u32 [#allocation11], 4
      %s689 = int_to_ptr.vmem [resolvable:$true] %s688
      %691 = dma.vmem_to_hbm [thread:$0]  %s689, 256, %s6, [#allocation4]
    $region49: #{tpu_custom_call.1} parent=1 // pred_fallthru
      _
    // Predicated region
    $region50: #{tpu_custom_call.1} parent=1 // pred_check
      _
    $region51: #{tpu_custom_call.1} parent=1 // pred_check_branch
      %693 = sbr.rel (0) target = $region53
    $region52: #{tpu_custom_call.1} parent=1 // pred_region
      %694 = dma.done [#allocation4], 256
    $region53: #{tpu_custom_call.1} parent=1 // pred_fallthru
      _
    %695 = vsyncpa [#allocation3], 1
    %696 = vsyncpa [#allocation6], 1
    %697 = vsyncpa [#allocation9], 1
    %698 = vsyncpa [#allocation4], 1

// kernel: tpu_custom_call.1
$region0: #{tpu_custom_call.1}
  #allocation0 [shape = 'u32[]', space=smem, size = 0x4, offset = 0x4, fixed_abs, tag = 'smem constant byte address 0x4 - core index']
  #allocation1 [shape = 'u32[144,128]{1,0:T(1,128)}', space=vmem, size = 0x12000, scoped, tag = 'internal scratch']
  %s0 = inlined_call_operand.hbm [shape: f32[8,128], index: 0, kind: input, shape index: {}]
  %s1 = inlined_call_operand.hbm [shape: f32[8,128], index: 1, kind: input, shape index: {}]
  %s2 = inlined_call_operand.hbm [shape: f32[8,128], index: 2, kind: input, shape index: {}]
  %s3 = inlined_call_operand.hbm [shape: bf16[128,512], index: 3, kind: input, shape index: {}]
  %s4 = inlined_call_operand.hbm [shape: bf16[128,512], index: 4, kind: input, shape index: {}]
  %s5 = inlined_call_operand.vmem [shape: f32[1,512], index: 5, kind: input, shape index: {}]
  %s6 = inlined_call_operand.hbm [shape: f32[8,256], index: 6, kind: output, shape index: {}]
  %s7 = sld [smem:[#allocation0]]
  $region54: #{tpu_custom_call.1} parent=0
    _
  %s9 = ssub.s32 1, %s7
  %s10 = scalar_select 0, %s9, %s7
  $region1: #{tpu_custom_call.1} parent=0
    #allocation2 [shape = 'u8[4096]{0}', space=vmem, size = 0x1000, scoped, tag = 'input window, operand 0, single buffered']
    #allocation3 [shape = 's32[1]{0}', space=sflag, size = 0x4, scoped, tag = 'scoped memory for tpu_custom_call.1']
    #allocation4 [shape = 's32[1]{0}', space=sflag, size = 0x4, scoped, tag = 'scoped memory for tpu_custom_call.1']
    #allocation5 [shape = 'u8[4096]{0}', space=vmem, size = 0x1000, scoped, tag = 'input window, operand 1, single buffered']
    #allocation6 [shape = 's32[1]{0}', space=sflag, size = 0x4, scoped, tag = 'scoped memory for tpu_custom_call.1']
    #allocation7 [shape = 'u8[4096]{0}', space=vmem, size = 0x1000, scoped, tag = 'input window, operand 2, single buffered']
    #allocation8 [shape = 'u8[131072]{0}', space=vmem, size = 0x20000, scoped, tag = 'input window, operand 3, single buffered']
    #allocation9 [shape = 's32[1]{0}', space=sflag, size = 0x4, scoped, tag = 'scoped memory for tpu_custom_call.1']
    #allocation10 [shape = 'u8[131072]{0}', space=vmem, size = 0x20000, scoped, tag = 'input window, operand 4, single buffered']
    #allocation11 [shape = 'u8[8192]{0}', space=vmem, size = 0x2000, scoped, tag = 'output window, operand 0, single buffered']
    %11 = vsyncpa [#allocation3], 0
    %12 = vsyncpa [#allocation6], 0
    %13 = vsyncpa [#allocation9], 0
    %14 = vsyncpa [#allocation4], 0
    // Predicated region
    $region2: #{tpu_custom_call.1} parent=1 // pred_check
      _
    $region3: #{tpu_custom_call.1} parent=1 // pred_check_branch
      %16 = sbr.rel (0) target = $region5
    $region4: #{tpu_custom_call.1} parent=1 // pred_region
      %s18 = ssub.s32 128, 128
      %19 = vsyncadd [#allocation3], %s18
      %s21 = sshll.u32 [#allocation2], 4
      %s22 = int_to_ptr.vmem [resolvable:$true] %s21
      %24 = dma.hbm_to_vmem [thread:$0]  %s0, 128, %s22, [#allocation3]
    $region5: #{tpu_custom_call.1} parent=1 // pred_fallthru
      _
    // Predicated region
    $region6: #{tpu_custom_call.1} parent=1 // pred_check
      _
    $region7: #{tpu_custom_call.1} parent=1 // pred_check_branch
      %26 = sbr.rel (0) target = $region9
    $region8: #{tpu_custom_call.1} parent=1 // pred_region
      %s28 = ssub.s32 128, 128
      %29 = vsyncadd [#allocation6], %s28
      %s31 = sshll.u32 [#allocation5], 4
      %s32 = int_to_ptr.vmem [resolvable:$true] %s31
      %34 = dma.hbm_to_vmem [thread:$0]  %s1, 128, %s32, [#allocation6]
    $region9: #{tpu_custom_call.1} parent=1 // pred_fallthru
      _
    // Predicated region
    $region10: #{tpu_custom_call.1} parent=1 // pred_check
      _
    $region11: #{tpu_custom_call.1} parent=1 // pred_check_branch
      %36 = sbr.rel (0) target = $region13
    $region12: #{tpu_custom_call.1} parent=1 // pred_region
      %s38 = ssub.s32 128, 128
      %39 = vsyncadd [#allocation6], %s38
      %s41 = sshll.u32 [#allocation7], 4
      %s42 = int_to_ptr.vmem [resolvable:$true] %s41
      %44 = dma.hbm_to_vmem [thread:$0]  %s2, 128, %s42, [#allocation6]
    $region13: #{tpu_custom_call.1} parent=1 // pred_fallthru
      _
    // Predicated region
    $region14: #{tpu_custom_call.1} parent=1 // pred_check
      _
    $region15: #{tpu_custom_call.1} parent=1 // pred_check_branch
      %46 = sbr.rel (0) target = $region17
    $region16: #{tpu_custom_call.1} parent=1 // pred_region
      %s48 = ssub.s32 4096, 4096
      %49 = vsyncadd [#allocation9], %s48
      %s50 = sshll.u32 [#allocation8], 4
      %s51 = int_to_ptr.vmem [resolvable:$true] %s50
      %56 = dma.hbm_to_vmem [thread:$0]  %s3, 4096, %s51, [#allocation9], 256, 256, 16
    $region17: #{tpu_custom_call.1} parent=1 // pred_fallthru
      _
    // Predicated region
    $region18: #{tpu_custom_call.1} parent=1 // pred_check
      _
    $region19: #{tpu_custom_call.1} parent=1 // pred_check_branch
      %58 = sbr.rel (0) target = $region21
    $region20: #{tpu_custom_call.1} parent=1 // pred_region
      %s60 = ssub.s32 4096, 4096
      %61 = vsyncadd [#allocation9], %s60
      %s62 = sshll.u32 [#allocation10], 4
      %s63 = int_to_ptr.vmem [resolvable:$true] %s62
      %68 = dma.hbm_to_vmem [thread:$0]  %s4, 4096, %s63, [#allocation9], 256, 256, 16
    $region21: #{tpu_custom_call.1} parent=1 // pred_fallthru
      _
    // Predicated region
    $region22: #{tpu_custom_call.1} parent=1 // pred_check
      _
    $region23: #{tpu_custom_call.1} parent=1 // pred_check_branch
      %70 = sbr.rel (0) target = $region25
    $region24: #{tpu_custom_call.1} parent=1 // pred_region
      _
    $region25: #{tpu_custom_call.1} parent=1 // pred_fallthru
      _
    // Predicated region
    $region26: #{tpu_custom_call.1} parent=1 // pred_check
      _
    $region27: #{tpu_custom_call.1} parent=1 // pred_check_branch
      %72 = sbr.rel (0) target = $region29
    $region28: #{tpu_custom_call.1} parent=1 // pred_region
      %73 = dma.done [#allocation3], 128
    $region29: #{tpu_custom_call.1} parent=1 // pred_fallthru
      _
    // Predicated region
    $region30: #{tpu_custom_call.1} parent=1 // pred_check
      _
    $region31: #{tpu_custom_call.1} parent=1 // pred_check_branch
      %75 = sbr.rel (0) target = $region33
    $region32: #{tpu_custom_call.1} parent=1 // pred_region
      %76 = dma.done [#allocation6], 128
    $region33: #{tpu_custom_call.1} parent=1 // pred_fallthru
      _
    // Predicated region
    $region34: #{tpu_custom_call.1} parent=1 // pred_check
      _
    $region35: #{tpu_custom_call.1} parent=1 // pred_check_branch
      %78 = sbr.rel (0) target = $region37
    $region36: #{tpu_custom_call.1} parent=1 // pred_region
      %79 = dma.done [#allocation6], 128
    $region37: #{tpu_custom_call.1} parent=1 // pred_fallthru
      _
    // Predicated region
    $region38: #{tpu_custom_call.1} parent=1 // pred_check
      _
    $region39: #{tpu_custom_call.1} parent=1 // pred_check_branch
      %81 = sbr.rel (0) target = $region41
    $region40: #{tpu_custom_call.1} parent=1 // pred_region
      %82 = dma.done [#allocation9], 4096
    $region41: #{tpu_custom_call.1} parent=1 // pred_fallthru
      _
    // Predicated region
    $region42: #{tpu_custom_call.1} parent=1 // pred_check
      _
    $region43: #{tpu_custom_call.1} parent=1 // pred_check_branch
      %84 = sbr.rel (0) target = $region45
    $region44: #{tpu_custom_call.1} parent=1 // pred_region
      %85 = dma.done [#allocation9], 4096
    $region45: #{tpu_custom_call.1} parent=1 // pred_fallthru
      _
    %v87 = vld [vmem:[#allocation2] sm:$0xff]
    %v88 = vpack.c.bf16 %v87, %v87
    %v89 = vld [vmem:[#allocation8] sm:$0xff]
    %v90 = vld [vmem:[#allocation8 + $0x8] sm:$0xff]
    %v91 = vld [vmem:[#allocation8 + $0x10] sm:$0xff]
    %v92 = vld [vmem:[#allocation8 + $0x18] sm:$0xff]
    %v93 = vld [vmem:[#allocation8 + $0x20] sm:$0xff]
    %v94 = vld [vmem:[#allocation8 + $0x28] sm:$0xff]
    %v95 = vld [vmem:[#allocation8 + $0x30] sm:$0xff]
    %v96 = vld [vmem:[#allocation8 + $0x38] sm:$0xff]
    %v97 = vld [vmem:[#allocation8 + $0x40] sm:$0xff]
    %v98 = vld [vmem:[#allocation8 + $0x48] sm:$0xff]
    %v99 = vld [vmem:[#allocation8 + $0x50] sm:$0xff]
    %v100 = vld [vmem:[#allocation8 + $0x58] sm:$0xff]
    %v101 = vld [vmem:[#allocation8 + $0x60] sm:$0xff]
    %v102 = vld [vmem:[#allocation8 + $0x68] sm:$0xff]
    %v103 = vld [vmem:[#allocation8 + $0x70] sm:$0xff]
    %v104 = vld [vmem:[#allocation8 + $0x78] sm:$0xff]
    %v105 = vld [vmem:[#allocation8 + $0x80] sm:$0xff]
    %v106 = vld [vmem:[#allocation8 + $0x88] sm:$0xff]
    %v107 = vld [vmem:[#allocation8 + $0x90] sm:$0xff]
    %v108 = vld [vmem:[#allocation8 + $0x98] sm:$0xff]
    %v109 = vld [vmem:[#allocation8 + $0xa0] sm:$0xff]
    %v110 = vld [vmem:[#allocation8 + $0xa8] sm:$0xff]
    %v111 = vld [vmem:[#allocation8 + $0xb0] sm:$0xff]
    %v112 = vld [vmem:[#allocation8 + $0xb8] sm:$0xff]
    %v113 = vld [vmem:[#allocation8 + $0xc0] sm:$0xff]
    %v114 = vld [vmem:[#allocation8 + $0xc8] sm:$0xff]
    %v115 = vld [vmem:[#allocation8 + $0xd0] sm:$0xff]
    %v116 = vld [vmem:[#allocation8 + $0xd8] sm:$0xff]
    %v117 = vld [vmem:[#allocation8 + $0xe0] sm:$0xff]
    %v118 = vld [vmem:[#allocation8 + $0xe8] sm:$0xff]
    %v119 = vld [vmem:[#allocation8 + $0xf0] sm:$0xff]
    %v120 = vld [vmem:[#allocation8 + $0xf8] sm:$0xff]
    %v121 = vld [vmem:[#allocation5] sm:$0xff]
    %v122 = vpack.c.bf16 %v121, %v121
    %v123 = vld [vmem:[#allocation10] sm:$0xff]
    %v124 = vld [vmem:[#allocation10 + $0x8] sm:$0xff]
    %v125 = vld [vmem:[#allocation10 + $0x10] sm:$0xff]
    %v126 = vld [vmem:[#allocation10 + $0x18] sm:$0xff]
    %v127 = vld [vmem:[#allocation10 + $0x20] sm:$0xff]
    %v128 = vld [vmem:[#allocation10 + $0x28] sm:$0xff]
    %v129 = vld [vmem:[#allocation10 + $0x30] sm:$0xff]
    %v130 = vld [vmem:[#allocation10 + $0x38] sm:$0xff]
    %v131 = vld [vmem:[#allocation10 + $0x40] sm:$0xff]
    %v132 = vld [vmem:[#allocation10 + $0x48] sm:$0xff]
    %v133 = vld [vmem:[#allocation10 + $0x50] sm:$0xff]
    %v134 = vld [vmem:[#allocation10 + $0x58] sm:$0xff]
    %v135 = vld [vmem:[#allocation10 + $0x60] sm:$0xff]
    %v136 = vld [vmem:[#allocation10 + $0x68] sm:$0xff]
    %v137 = vld [vmem:[#allocation10 + $0x70] sm:$0xff]
    %v138 = vld [vmem:[#allocation10 + $0x78] sm:$0xff]
    %v139 = vld [vmem:[#allocation10 + $0x80] sm:$0xff]
    %v140 = vld [vmem:[#allocation10 + $0x88] sm:$0xff]
    %v141 = vld [vmem:[#allocation10 + $0x90] sm:$0xff]
    %v142 = vld [vmem:[#allocation10 + $0x98] sm:$0xff]
    %v143 = vld [vmem:[#allocation10 + $0xa0] sm:$0xff]
    %v144 = vld [vmem:[#allocation10 + $0xa8] sm:$0xff]
    %v145 = vld [vmem:[#allocation10 + $0xb0] sm:$0xff]
    %v146 = vld [vmem:[#allocation10 + $0xb8] sm:$0xff]
    %v147 = vld [vmem:[#allocation10 + $0xc0] sm:$0xff]
    %v148 = vld [vmem:[#allocation10 + $0xc8] sm:$0xff]
    %v149 = vld [vmem:[#allocation10 + $0xd0] sm:$0xff]
    %v150 = vld [vmem:[#allocation10 + $0xd8] sm:$0xff]
    %v151 = vld [vmem:[#allocation10 + $0xe0] sm:$0xff]
    %v152 = vld [vmem:[#allocation10 + $0xe8] sm:$0xff]
    %v153 = vld [vmem:[#allocation10 + $0xf0] sm:$0xff]
    %v154 = vld [vmem:[#allocation10 + $0xf8] sm:$0xff]
    %v187 = vunpack.c.l.b16 %v123
    %v188 = vunpack.c.h.b16 %v123
    %v189 = vunpack.c.l.b16 %v124
    %v190 = vunpack.c.h.b16 %v124
    %v191 = vunpack.c.l.b16 %v125
    %v192 = vunpack.c.h.b16 %v125
    %v193 = vunpack.c.l.b16 %v126
    %v194 = vunpack.c.h.b16 %v126
    %v195 = vunpack.c.l.b16 %v127
    %v196 = vunpack.c.h.b16 %v127
    %v197 = vunpack.c.l.b16 %v128
    %v198 = vunpack.c.h.b16 %v128
    %v199 = vunpack.c.l.b16 %v129
    %v200 = vunpack.c.h.b16 %v129
    %v201 = vunpack.c.l.b16 %v130
    %v202 = vunpack.c.h.b16 %v130
    %v203 = vunpack.c.l.b16 %v131
    %v204 = vunpack.c.h.b16 %v131
    %v205 = vunpack.c.l.b16 %v132
    %v206 = vunpack.c.h.b16 %v132
    %v207 = vunpack.c.l.b16 %v133
    %v208 = vunpack.c.h.b16 %v133
    %v209 = vunpack.c.l.b16 %v134
    %v210 = vunpack.c.h.b16 %v134
    %v211 = vunpack.c.l.b16 %v135
    %v212 = vunpack.c.h.b16 %v135
    %v213 = vunpack.c.l.b16 %v136
    %v214 = vunpack.c.h.b16 %v136
    %v215 = vunpack.c.l.b16 %v137
    %v216 = vunpack.c.h.b16 %v137
    %v217 = vunpack.c.l.b16 %v138
    %v218 = vunpack.c.h.b16 %v138
    %v219 = vunpack.c.l.b16 %v139
    %v220 = vunpack.c.h.b16 %v139
    %v221 = vunpack.c.l.b16 %v140
    %v222 = vunpack.c.h.b16 %v140
    %v223 = vunpack.c.l.b16 %v141
    %v224 = vunpack.c.h.b16 %v141
    %v225 = vunpack.c.l.b16 %v142
    %v226 = vunpack.c.h.b16 %v142
    %v227 = vunpack.c.l.b16 %v143
    %v228 = vunpack.c.h.b16 %v143
    %v229 = vunpack.c.l.b16 %v144
    %v230 = vunpack.c.h.b16 %v144
    %v231 = vunpack.c.l.b16 %v145
    %v232 = vunpack.c.h.b16 %v145
    %v233 = vunpack.c.l.b16 %v146
    %v234 = vunpack.c.h.b16 %v146
    %v235 = vunpack.c.l.b16 %v147
    %v236 = vunpack.c.h.b16 %v147
    %v237 = vunpack.c.l.b16 %v148
    %v238 = vunpack.c.h.b16 %v148
    %v239 = vunpack.c.l.b16 %v149
    %v240 = vunpack.c.h.b16 %v149
    %v241 = vunpack.c.l.b16 %v150
    %v242 = vunpack.c.h.b16 %v150
    %v243 = vunpack.c.l.b16 %v151
    %v244 = vunpack.c.h.b16 %v151
    %v245 = vunpack.c.l.b16 %v152
    %v246 = vunpack.c.h.b16 %v152
    %v247 = vunpack.c.l.b16 %v153
    %v248 = vunpack.c.h.b16 %v153
    %v249 = vunpack.c.l.b16 %v154
    %v250 = vunpack.c.h.b16 %v154
    %v251 = vpack.c.b16 %v191, %v187
    %v252 = vpack.c.b16 %v192, %v188
    %v253 = vpack.c.b16 %v193, %v189
    %v254 = vpack.c.b16 %v194, %v190
    %v255 = vpack.c.b16 %v199, %v195
    %v256 = vpack.c.b16 %v200, %v196
    %v257 = vpack.c.b16 %v201, %v197
    %v258 = vpack.c.b16 %v202, %v198
    %v259 = vpack.c.b16 %v207, %v203
    %v260 = vpack.c.b16 %v208, %v204
    %v261 = vpack.c.b16 %v209, %v205
    %v262 = vpack.c.b16 %v210, %v206
    %v263 = vpack.c.b16 %v215, %v211
    %v264 = vpack.c.b16 %v216, %v212
    %v265 = vpack.c.b16 %v217, %v213
    %v266 = vpack.c.b16 %v218, %v214
    %v267 = vpack.c.b16 %v223, %v219
    %v268 = vpack.c.b16 %v224, %v220
    %v269 = vpack.c.b16 %v225, %v221
    %v270 = vpack.c.b16 %v226, %v222
    %v271 = vpack.c.b16 %v231, %v227
    %v272 = vpack.c.b16 %v232, %v228
    %v273 = vpack.c.b16 %v233, %v229
    %v274 = vpack.c.b16 %v234, %v230
    %v275 = vpack.c.b16 %v239, %v235
    %v276 = vpack.c.b16 %v240, %v236
    %v277 = vpack.c.b16 %v241, %v237
    %v278 = vpack.c.b16 %v242, %v238
    %v279 = vpack.c.b16 %v247, %v243
    %v280 = vpack.c.b16 %v248, %v244
    %v281 = vpack.c.b16 %v249, %v245
    %v282 = vpack.c.b16 %v250, %v246
    %315 = vmatprep.subr.bf16.mxu0 %v280
    %316 = vmatpush1.bf16.msra.mxu0 %v279
    %317 = vmatprep.subr.bf16.mxu0 %v276
    %318 = vmatpush1.bf16.msra.mxu0 %v275
    %319 = vmatprep.subr.bf16.mxu0 %v272
    %320 = vmatpush1.bf16.msra.mxu0 %v271
    %321 = vmatprep.subr.bf16.mxu0 %v268
    %322 = vmatpush1.bf16.msra.mxu0 %v267
    %323 = vmatprep.subr.bf16.mxu0 %v264
    %324 = vmatpush1.bf16.msra.mxu0 %v263
    %325 = vmatprep.subr.bf16.mxu0 %v260
    %326 = vmatpush1.bf16.msra.mxu0 %v259
    %327 = vmatprep.subr.bf16.mxu0 %v256
    %328 = vmatpush1.bf16.msra.mxu0 %v255
    %329 = vmatprep.subr.bf16.mxu0 %v252
    %330 = vmatpush1.bf16.msra.mxu0 %v251
    %331 = vmatprep.subr.bf16.mxu0 0
    %332 = vmatpush2.bf16.msra.mxu0 0
    %333 = vmatprep.subr.bf16.mxu0 0
    %334 = vmatpush2.bf16.msra.mxu0 0
    %335 = vmatprep.subr.bf16.mxu0 0
    %336 = vmatpush2.bf16.msra.mxu0 0
    %337 = vmatprep.subr.bf16.mxu0 0
    %338 = vmatpush2.bf16.msra.mxu0 0
    %339 = vmatprep.subr.bf16.mxu0 0
    %340 = vmatpush2.bf16.msra.mxu0 0
    %341 = vmatprep.subr.bf16.mxu0 0
    %342 = vmatpush2.bf16.msra.mxu0 0
    %343 = vmatprep.subr.bf16.mxu0 0
    %344 = vmatpush2.bf16.msra.mxu0 0
    %345 = vmatprep.subr.bf16.mxu0 0
    %346 = vmatpush2.bf16.msra.mxu0 0
    %347 = vmatprep.mubr.bf16.mxu0 0
    %348 = vmatmul.mubr.bf16.gmra.mxu0 %v122
    %v349 = vpop.f32.mrf.mxu0
    %v350 = vadd.f32 0.0, %v349
    %v351 = vpop.f32.mrf.mxu0
    %v352 = vadd.f32 0.0, %v351
    %v353 = vpop.f32.mrf.mxu0
    %v354 = vpop.f32.mrf.mxu0
    %355 = vdwg.mxu0
    %356 = vmatprep.subr.bf16.mxu0 %v282
    %357 = vmatpush1.bf16.msra.mxu0 %v281
    %358 = vmatprep.subr.bf16.mxu0 %v278
    %359 = vmatpush1.bf16.msra.mxu0 %v277
    %360 = vmatprep.subr.bf16.mxu0 %v274
    %361 = vmatpush1.bf16.msra.mxu0 %v273
    %362 = vmatprep.subr.bf16.mxu0 %v270
    %363 = vmatpush1.bf16.msra.mxu0 %v269
    %364 = vmatprep.subr.bf16.mxu0 %v266
    %365 = vmatpush1.bf16.msra.mxu0 %v265
    %366 = vmatprep.subr.bf16.mxu0 %v262
    %367 = vmatpush1.bf16.msra.mxu0 %v261
    %368 = vmatprep.subr.bf16.mxu0 %v258
    %369 = vmatpush1.bf16.msra.mxu0 %v257
    %370 = vmatprep.subr.bf16.mxu0 %v254
    %371 = vmatpush1.bf16.msra.mxu0 %v253
    %372 = vmatprep.subr.bf16.mxu0 0
    %373 = vmatpush2.bf16.msra.mxu0 0
    %374 = vmatprep.subr.bf16.mxu0 0
    %375 = vmatpush2.bf16.msra.mxu0 0
    %376 = vmatprep.subr.bf16.mxu0 0
    %377 = vmatpush2.bf16.msra.mxu0 0
    %378 = vmatprep.subr.bf16.mxu0 0
    %379 = vmatpush2.bf16.msra.mxu0 0
    %380 = vmatprep.subr.bf16.mxu0 0
    %381 = vmatpush2.bf16.msra.mxu0 0
    %382 = vmatprep.subr.bf16.mxu0 0
    %383 = vmatpush2.bf16.msra.mxu0 0
    %384 = vmatprep.subr.bf16.mxu0 0
    %385 = vmatpush2.bf16.msra.mxu0 0
    %386 = vmatprep.subr.bf16.mxu0 0
    %387 = vmatpush2.bf16.msra.mxu0 0
    %388 = vmatprep.mubr.bf16.mxu0 0
    %389 = vmatmul.mubr.bf16.gmra.mxu0 %v122
    %v390 = vpop.f32.mrf.mxu0
    %v391 = vadd.f32 0.0, %v390
    %v392 = vpop.f32.mrf.mxu0
    %v393 = vadd.f32 0.0, %v392
    %v394 = vpop.f32.mrf.mxu0
    %v395 = vpop.f32.mrf.mxu0
    %396 = vdwg.mxu0
    %v429 = vunpack.c.l.b16 %v89
    %v430 = vunpack.c.h.b16 %v89
    %v431 = vunpack.c.l.b16 %v90
    %v432 = vunpack.c.h.b16 %v90
    %v433 = vunpack.c.l.b16 %v91
    %v434 = vunpack.c.h.b16 %v91
    %v435 = vunpack.c.l.b16 %v92
    %v436 = vunpack.c.h.b16 %v92
    %v437 = vunpack.c.l.b16 %v93
    %v438 = vunpack.c.h.b16 %v93
    %v439 = vunpack.c.l.b16 %v94
    %v440 = vunpack.c.h.b16 %v94
    %v441 = vunpack.c.l.b16 %v95
    %v442 = vunpack.c.h.b16 %v95
    %v443 = vunpack.c.l.b16 %v96
    %v444 = vunpack.c.h.b16 %v96
    %v445 = vunpack.c.l.b16 %v97
    %v446 = vunpack.c.h.b16 %v97
    %v447 = vunpack.c.l.b16 %v98
    %v448 = vunpack.c.h.b16 %v98
    %v449 = vunpack.c.l.b16 %v99
    %v450 = vunpack.c.h.b16 %v99
    %v451 = vunpack.c.l.b16 %v100
    %v452 = vunpack.c.h.b16 %v100
    %v453 = vunpack.c.l.b16 %v101
    %v454 = vunpack.c.h.b16 %v101
    %v455 = vunpack.c.l.b16 %v102
    %v456 = vunpack.c.h.b16 %v102
    %v457 = vunpack.c.l.b16 %v103
    %v458 = vunpack.c.h.b16 %v103
    %v459 = vunpack.c.l.b16 %v104
    %v460 = vunpack.c.h.b16 %v104
    %v461 = vunpack.c.l.b16 %v105
    %v462 = vunpack.c.h.b16 %v105
    %v463 = vunpack.c.l.b16 %v106
    %v464 = vunpack.c.h.b16 %v106
    %v465 = vunpack.c.l.b16 %v107
    %v466 = vunpack.c.h.b16 %v107
    %v467 = vunpack.c.l.b16 %v108
    %v468 = vunpack.c.h.b16 %v108
    %v469 = vunpack.c.l.b16 %v109
    %v470 = vunpack.c.h.b16 %v109
    %v471 = vunpack.c.l.b16 %v110
    %v472 = vunpack.c.h.b16 %v110
    %v473 = vunpack.c.l.b16 %v111
    %v474 = vunpack.c.h.b16 %v111
    %v475 = vunpack.c.l.b16 %v112
    %v476 = vunpack.c.h.b16 %v112
    %v477 = vunpack.c.l.b16 %v113
    %v478 = vunpack.c.h.b16 %v113
    %v479 = vunpack.c.l.b16 %v114
    %v480 = vunpack.c.h.b16 %v114
    %v481 = vunpack.c.l.b16 %v115
    %v482 = vunpack.c.h.b16 %v115
    %v483 = vunpack.c.l.b16 %v116
    %v484 = vunpack.c.h.b16 %v116
    %v485 = vunpack.c.l.b16 %v117
    %v486 = vunpack.c.h.b16 %v117
    %v487 = vunpack.c.l.b16 %v118
    %v488 = vunpack.c.h.b16 %v118
    %v489 = vunpack.c.l.b16 %v119
    %v490 = vunpack.c.h.b16 %v119
    %v491 = vunpack.c.l.b16 %v120
    %v492 = vunpack.c.h.b16 %v120
    %v493 = vpack.c.b16 %v433, %v429
    %v494 = vpack.c.b16 %v434, %v430
    %v495 = vpack.c.b16 %v435, %v431
    %v496 = vpack.c.b16 %v436, %v432
    %v497 = vpack.c.b16 %v441, %v437
    %v498 = vpack.c.b16 %v442, %v438
    %v499 = vpack.c.b16 %v443, %v439
    %v500 = vpack.c.b16 %v444, %v440
    %v501 = vpack.c.b16 %v449, %v445
    %v502 = vpack.c.b16 %v450, %v446
    %v503 = vpack.c.b16 %v451, %v447
    %v504 = vpack.c.b16 %v452, %v448
    %v505 = vpack.c.b16 %v457, %v453
    %v506 = vpack.c.b16 %v458, %v454
    %v507 = vpack.c.b16 %v459, %v455
    %v508 = vpack.c.b16 %v460, %v456
    %v509 = vpack.c.b16 %v465, %v461
    %v510 = vpack.c.b16 %v466, %v462
    %v511 = vpack.c.b16 %v467, %v463
    %v512 = vpack.c.b16 %v468, %v464
    %v513 = vpack.c.b16 %v473, %v469
    %v514 = vpack.c.b16 %v474, %v470
    %v515 = vpack.c.b16 %v475, %v471
    %v516 = vpack.c.b16 %v476, %v472
    %v517 = vpack.c.b16 %v481, %v477
    %v518 = vpack.c.b16 %v482, %v478
    %v519 = vpack.c.b16 %v483, %v479
    %v520 = vpack.c.b16 %v484, %v480
    %v521 = vpack.c.b16 %v489, %v485
    %v522 = vpack.c.b16 %v490, %v486
    %v523 = vpack.c.b16 %v491, %v487
    %v524 = vpack.c.b16 %v492, %v488
    %557 = vmatprep.subr.bf16.mxu0 %v522
    %558 = vmatpush1.bf16.msra.mxu0 %v521
    %559 = vmatprep.subr.bf16.mxu0 %v518
    %560 = vmatpush1.bf16.msra.mxu0 %v517
    %561 = vmatprep.subr.bf16.mxu0 %v514
    %562 = vmatpush1.bf16.msra.mxu0 %v513
    %563 = vmatprep.subr.bf16.mxu0 %v510
    %564 = vmatpush1.bf16.msra.mxu0 %v509
    %565 = vmatprep.subr.bf16.mxu0 %v506
    %566 = vmatpush1.bf16.msra.mxu0 %v505
    %567 = vmatprep.subr.bf16.mxu0 %v502
    %568 = vmatpush1.bf16.msra.mxu0 %v501
    %569 = vmatprep.subr.bf16.mxu0 %v498
    %570 = vmatpush1.bf16.msra.mxu0 %v497
    %571 = vmatprep.subr.bf16.mxu0 %v494
    %572 = vmatpush1.bf16.msra.mxu0 %v493
    %573 = vmatprep.subr.bf16.mxu0 0
    %574 = vmatpush2.bf16.msra.mxu0 0
    %575 = vmatprep.subr.bf16.mxu0 0
    %576 = vmatpush2.bf16.msra.mxu0 0
    %577 = vmatprep.subr.bf16.mxu0 0
    %578 = vmatpush2.bf16.msra.mxu0 0
    %579 = vmatprep.subr.bf16.mxu0 0
    %580 = vmatpush2.bf16.msra.mxu0 0
    %581 = vmatprep.subr.bf16.mxu0 0
    %582 = vmatpush2.bf16.msra.mxu0 0
    %583 = vmatprep.subr.bf16.mxu0 0
    %584 = vmatpush2.bf16.msra.mxu0 0
    %585 = vmatprep.subr.bf16.mxu0 0
    %586 = vmatpush2.bf16.msra.mxu0 0
    %587 = vmatprep.subr.bf16.mxu0 0
    %588 = vmatpush2.bf16.msra.mxu0 0
    %589 = vmatprep.mubr.bf16.mxu0 0
    %590 = vmatmul.mubr.bf16.gmra.mxu0 %v88
    %v591 = vpop.f32.mrf.mxu0
    %v592 = vadd.f32 %v350, %v591
    %v593 = vpop.f32.mrf.mxu0
    %v594 = vadd.f32 %v352, %v593
    %v595 = vpop.f32.mrf.mxu0
    %v596 = vpop.f32.mrf.mxu0
    %597 = vdwg.mxu0
    %598 = vmatprep.subr.bf16.mxu0 %v524
    %599 = vmatpush1.bf16.msra.mxu0 %v523
    %600 = vmatprep.subr.bf16.mxu0 %v520
    %601 = vmatpush1.bf16.msra.mxu0 %v519
    %602 = vmatprep.subr.bf16.mxu0 %v516
    %603 = vmatpush1.bf16.msra.mxu0 %v515
    %604 = vmatprep.subr.bf16.mxu0 %v512
    %605 = vmatpush1.bf16.msra.mxu0 %v511
    %606 = vmatprep.subr.bf16.mxu0 %v508
    %607 = vmatpush1.bf16.msra.mxu0 %v507
    %608 = vmatprep.subr.bf16.mxu0 %v504
    %609 = vmatpush1.bf16.msra.mxu0 %v503
    %610 = vmatprep.subr.bf16.mxu0 %v500
    %611 = vmatpush1.bf16.msra.mxu0 %v499
    %612 = vmatprep.subr.bf16.mxu0 %v496
    %613 = vmatpush1.bf16.msra.mxu0 %v495
    %614 = vmatprep.subr.bf16.mxu0 0
    %615 = vmatpush2.bf16.msra.mxu0 0
    %616 = vmatprep.subr.bf16.mxu0 0
    %617 = vmatpush2.bf16.msra.mxu0 0
    %618 = vmatprep.subr.bf16.mxu0 0
    %619 = vmatpush2.bf16.msra.mxu0 0
    %620 = vmatprep.subr.bf16.mxu0 0
    %621 = vmatpush2.bf16.msra.mxu0 0
    %622 = vmatprep.subr.bf16.mxu0 0
    %623 = vmatpush2.bf16.msra.mxu0 0
    %624 = vmatprep.subr.bf16.mxu0 0
    %625 = vmatpush2.bf16.msra.mxu0 0
    %626 = vmatprep.subr.bf16.mxu0 0
    %627 = vmatpush2.bf16.msra.mxu0 0
    %628 = vmatprep.subr.bf16.mxu0 0
    %629 = vmatpush2.bf16.msra.mxu0 0
    %630 = vmatprep.mubr.bf16.mxu0 0
    %631 = vmatmul.mubr.bf16.gmra.mxu0 %v88
    %v632 = vpop.f32.mrf.mxu0
    %v633 = vadd.f32 %v391, %v632
    %v634 = vpop.f32.mrf.mxu0
    %v635 = vadd.f32 %v393, %v634
    %v636 = vpop.f32.mrf.mxu0
    %v637 = vpop.f32.mrf.mxu0
    %638 = vdwg.mxu0
    %v639 = vld [vmem:[%s5] sm:$0xf]
    %v641 = vlaneseq
    %v642 = vshrl.u32 %v641, 7
    %v643 = vsub.s32 0, %v642
    %v644 = vrot.slane %v639, %v643
    %v645 = vlaneseq
    %v646 = vshrl.u32 %v645, 7
    %v647 = vsub.s32 1, %v646
    %v648 = vrot.slane %v639, %v647
    %v649 = vlaneseq
    %v650 = vshrl.u32 %v649, 7
    %v651 = vsub.s32 2, %v650
    %v652 = vrot.slane %v639, %v651
    %v653 = vlaneseq
    %v654 = vshrl.u32 %v653, 7
    %v655 = vsub.s32 3, %v654
    %v656 = vrot.slane %v639, %v655
    %v661 = vadd.f32 %v592, %v644
    %v662 = vadd.f32 %v594, %v648
    %v663 = vadd.f32 %v633, %v652
    %v664 = vadd.f32 %v635, %v656
    %v665 = vtanh.pop %v661
    %v666 = vtanh.pop %v662
    %v667 = vtanh.pop %v663
    %v668 = vtanh.pop %v664
    %v669 = vld [vmem:[#allocation7] sm:$0xff]
    %v670 = vadd.f32 %v666, 1.0
    %v671 = vmul.f32 %v670, %v669
    %v672 = vadd.f32 %v665, 1.0
    %v673 = vmul.f32 %v672, %v667
    %v674 = vadd.f32 %v671, %v673
    %v675 = vmul.f32 %v674, 0.5
    %v676 = vadd.f32 %v668, 1.0
    %v677 = vmul.f32 %v676, 0.5
    %v678 = vtanh.pop %v675
    %v679 = vmul.f32 %v677, %v678
    %680 = vst [vmem:[#allocation11] sm:$0xff] %v679
    %681 = vst [vmem:[#allocation11 + $0x8] sm:$0xff] %v675
    // Predicated region
    $region46: #{tpu_custom_call.1} parent=1 // pred_check
      _
    $region47: #{tpu_custom_call.1} parent=1 // pred_check_branch
      %683 = sbr.rel (0) target = $region49
    $region48: #{tpu_custom_call.1} parent=1 // pred_region
      %s685 = ssub.s32 256, 256
      %686 = vsyncadd [#allocation4], %s685
      %s688 = sshll.u32 [#allocation11], 4
      %s689 = int_to_ptr.vmem [resolvable:$true] %s688
      %691 = dma.vmem_to_hbm [thread:$0]  %s689, 256, %s6, [#allocation4]
    $region49: #{tpu_custom_call.1} parent=1 // pred_fallthru
      _
    // Predicated region
    $region50: #{tpu_custom_call.1} parent=1 // pred_check
      _
    $region51: #{tpu_custom_call.1} parent=1 // pred_check_branch
      %693 = sbr.rel (0) target = $region53
    $region52: #{tpu_custom_call.1} parent=1 // pred_region
      %694 = dma.done [#allocation4], 256
    $region53: #{tpu_custom_call.1} parent=1 // pred_fallthru
      _
    %695 = vsyncpa [#allocation3], 1
    %696 = vsyncpa [#allocation6], 1
    %697 = vsyncpa [#allocation9], 1
    %698 = vsyncpa [#allocation4], 1

</llo_original>
